<compile_context>
chip_gen: v7x
topology: tpu7x:2x2x1
jax: 0.10.0
libtpu: 0.0.40
codegen_flags: <defaults>
</compile_context>

<pallas_src>
import jax
import jax.numpy as jnp
from jax.experimental import pallas as pl
from jax.experimental.pallas import tpu as pltpu


def _round_up(x: int, m: int) -> int:
    return ((x + m - 1) // m) * m


def _choose_tile_p(n_pairs: int, tile_p_max: int = 1024) -> int:
    # Big tiles amortize per-step pipeline overhead; keep >= 4 grid steps so
    # the "parallel" pair axis can shard across the 2 TensorCores of v7x.
    quarter = -(-n_pairs // 4)
    return max(8, min(tile_p_max, _round_up(quarter, 8)))


def _vmem_capacity_bytes() -> int:
    try:
        return int(pltpu.get_tpu_info().vmem_capacity_bytes)
    except Exception:
        return 64 * 1024 * 1024  # conservative (v7x per-TensorCore)


# -----------------------------------------------------------------------------
# Kernel: fused in-VMEM gather + (.. + basis) + MLP (bf16 MXU operands).
# -----------------------------------------------------------------------------
def _make_pilayer_kernel(n_layers: int, widths: list[int], n_atoms: int,
                         use_onehot: bool):
    def kernel(idx_ref, basis_ref, prop_ref, bias_ref, *rest):
        w_refs = rest[:n_layers]
        out_ref = rest[n_layers]

        tile_p = basis_ref.shape[0]
        n_atoms_res = prop_ref.shape[0]          # row-padded to a multiple of 8

        ids = idx_ref[...]                        # (tile_p, 2) int32
        ids_i = ids[:, 0:1]
        ids_j = ids[:, 1:2]
        prop = prop_ref[...]                      # (n_atoms_res, c0) f32

        if use_onehot:
            # Small-atom path: gather + (prop_i + prop_j) fused into one MXU
            # matmul.  If idx_i == idx_j the one-hot sum is 2 == prop_i+prop_j.
            atom_ids = jax.lax.broadcasted_iota(
                jnp.int32, (tile_p, n_atoms_res), 1)
            onehot = ((atom_ids == ids_i).astype(jnp.float32)
                      + (atom_ids == ids_j).astype(jnp.float32))
            gathered = jnp.dot(onehot, prop,
                               preferred_element_type=jnp.float32)
        else:
            # Large-atom path: O(P*C) VMEM gather instead of O(P*A*C) matmul.
            ci = jnp.clip(ids[:, 0], 0, n_atoms - 1)
            cj = jnp.clip(ids[:, 1], 0, n_atoms - 1)
            gathered = jnp.take(prop, ci, axis=0) + jnp.take(prop, cj, axis=0)

        x = gathered + basis_ref[...]             # f32, true feature width

        # MLP: bf16 MXU operands, f32 accumulation, f32 bias add + tanh.
        for l in range(n_layers):
            c_l = widths[l + 1]
            w = w_refs[l][...]                                   # bf16
            b = bias_ref[pl.ds(l, 1), pl.ds(0, c_l)]             # (1, c_l) f32
            x = jnp.dot(x.astype(jnp.bfloat16), w,
                        preferred_element_type=jnp.float32) + b
            if l < n_layers - 1:
                x = jnp.tanh(x)

        out_ref[...] = x.astype(out_ref.dtype)

    return kernel


# -----------------------------------------------------------------------------
# Wrapper
# -----------------------------------------------------------------------------
def pilayer_forward(idx_i, idx_j, prop, basis, params, *,
                    tile_p=None, tile_p_max=1024, onehot_max_atoms=512):
    """PILayer.forward.

    idx_i, idx_j : int32 [n_pairs]
    prop         : f32   [n_atoms, n_nodes[0]]
    basis        : f32   [n_pairs, n_nodes[0]]
    params       : list of (W [c_in, c_out], b [1, c_out]) per Linear layer
    returns      : f32   [n_pairs, n_nodes[-1]]
    """
    n_pairs, c0 = basis.shape
    n_atoms = int(prop.shape[0])
    n_layers = len(params)
    assert n_layers >= 1

    widths = [int(c0)] + [int(w.shape[1]) for (w, _) in params]
    c_out = widths[-1]
    c_max = max(widths[1:])

    if tile_p is None:
        tile_p = _choose_tile_p(int(n_pairs), tile_p_max)
    grid = (int(pl.cdiv(int(n_pairs), tile_p)),)

    f32 = jnp.float32
    # Only prop's (tiny) row count is padded; feature dims keep true widths so
    # the streamed basis/output HBM traffic is not inflated.
    n_atoms_pad = _round_up(n_atoms, 8)
    prop_p = jnp.pad(prop.astype(f32), ((0, n_atoms_pad - n_atoms), (0, 0)))
    basis_f = basis.astype(f32)
    idx_pair = jnp.stack(
        [idx_i.astype(jnp.int32), idx_j.astype(jnp.int32)], axis=1)

    ws = [w.astype(jnp.bfloat16) for (w, _) in params]       # bf16 MXU operands
    biases = jnp.zeros((n_layers, c_max), f32)
    for l, (_, b) in enumerate(params):
        biases = biases.at[l, : widths[l + 1]].set(b.reshape(-1).astype(f32))

    use_onehot = n_atoms <= onehot_max_atoms
    kernel = _make_pilayer_kernel(n_layers, widths, n_atoms, use_onehot)

    # --- VMEM budget: double-buffered streams + resident params + temporaries.
    stream = 2 * tile_p * (2 * 4 + c0 * 4 + c_out * 4)        # idx+basis in, out
    resident = 2 * (n_atoms_pad * c0 * 4                      # prop (f32)
                    + n_layers * c_max * 4                    # packed biases
                    + sum(int(w.size) * 2 for w in ws))       # bf16 weights
    interm = 4 * tile_p * max(widths) * 4                     # activation copies
    if use_onehot:
        interm += tile_p * n_atoms_pad * 3 * 4                # iota/cmp/one-hot
    vmem_needed = stream + resident + interm
    cap = _vmem_capacity_bytes()
    vmem_limit = int(min(int(cap * 0.9),
                         max(32 * 1024 * 1024, 2 * vmem_needed)))

    def _in_specs(resident_pm):
        kw = {} if resident_pm is None else {"pipeline_mode": resident_pm}
        specs = [
            pl.BlockSpec((tile_p, 2), lambda i: (i, 0)),          # packed idx
            pl.BlockSpec((tile_p, c0), lambda i: (i, 0)),         # basis tile
            pl.BlockSpec((n_atoms_pad, c0), lambda i: (0, 0), **kw),   # prop
            pl.BlockSpec((n_layers, c_max), lambda i: (0, 0), **kw),   # biases
        ]
        specs += [pl.BlockSpec(tuple(int(s) for s in w.shape),
                               lambda i: (0, 0), **kw) for w in ws]    # weights
        return specs

    def _call(resident_pm):
        return pl.pallas_call(
            kernel,
            out_shape=jax.ShapeDtypeStruct((n_pairs, c_out), f32),
            grid_spec=pltpu.PrefetchScalarGridSpec(
                num_scalar_prefetch=0,
                grid=grid,
                in_specs=_in_specs(resident_pm),
                out_specs=pl.BlockSpec((tile_p, c_out), lambda i: (i, 0)),
            ),
            compiler_params=pltpu.CompilerParams(
                dimension_semantics=("parallel",),
                vmem_limit_bytes=vmem_limit),
        )(idx_pair, basis_f, prop_p, biases, *ws)

    try:
        # Single-buffer the grid-invariant params so they don't take 2x VMEM
        # (important on v7x's 64 MiB VMEM for large n_atoms / wide layers).
        return _call(pl.Buffered(1))
    except Exception:
        # pipeline_mode not supported for pallas_call BlockSpecs on this jax
        # build: fall back to default (double-buffered) residents.
        return _call(None)


# -----------------------------------------------------------------------------
# Deterministic parameter init (shapes implied by build_mlp(n_nodes))
# -----------------------------------------------------------------------------
def init_params(key, n_nodes):
    params = []
    for c_in, c_out in zip(n_nodes[:-1], n_nodes[1:]):
        key, kw, kb = jax.random.split(key, 3)
        bound = 1.0 / (c_in ** 0.5)   # same scale family as torch.nn.Linear
        w = jax.random.uniform(kw, (c_in, c_out), jnp.float32, -bound, bound)
        b = jax.random.uniform(kb, (1, c_out), jnp.float32, -bound, bound)
        params.append((w, b))
    return params


# -----------------------------------------------------------------------------
# Pure-JAX reference for validation
# -----------------------------------------------------------------------------
def pilayer_ref(idx_i, idx_j, prop, basis, params):
    x = prop[idx_i] + basis + prop[idx_j]
    n_layers = len(params)
    for l, (w, b) in enumerate(params):
        x = jnp.dot(x, w, precision=jax.lax.Precision.HIGHEST) + b
        if l < n_layers - 1:
            x = jnp.tanh(x)
    return x


if __name__ == "__main__":
    # Small shapes consistent with PILayer.forward; n_pairs deliberately not a
    # multiple of the pair tile so the partial-tail-block path is exercised.
    n_atoms = 12
    n_pairs = 100
    n_nodes = [16, 32, 32]   # PILayer(n_nodes=[16, 32, 32], activation=tanh)

    key = jax.random.PRNGKey(0)
    k_prop, k_basis, k_i, k_j, k_par = jax.random.split(key, 5)

    prop = jax.random.normal(k_prop, (n_atoms, n_nodes[0]), jnp.float32)
    basis = jax.random.normal(k_basis, (n_pairs, n_nodes[0]), jnp.float32)
    idx_i = jax.random.randint(k_i, (n_pairs,), 0, n_atoms, jnp.int32)
    idx_j = jax.random.randint(k_j, (n_pairs,), 0, n_atoms, jnp.int32)
    params = init_params(k_par, n_nodes)

    out = pilayer_forward(idx_i, idx_j, prop, basis, params)
    out = jax.block_until_ready(out)

    ref = pilayer_ref(idx_i, idx_j, prop, basis, params)
    assert out.shape == (n_pairs, n_nodes[-1])
    # bf16 MXU operands (f32 accumulation) -> relaxed tolerance vs f32 ref.
    err = float(jnp.max(jnp.abs(out - ref)))
    assert err < 5e-2, f"mismatch vs JAX reference: max abs err {err}"

    print("KERNEL_OK")
</pallas_src>

<mosaic_0001>
module attributes {stable_mosaic.version = 11 : i64} {
  func.func @kernel(%arg0: i32, %arg1: memref<32x2xi32, #tpu.memory_space<vmem>>, %arg2: memref<32x16xf32, #tpu.memory_space<vmem>>, %arg3: memref<16x16xf32, #tpu.memory_space<vmem>>, %arg4: memref<2x32xf32, #tpu.memory_space<vmem>>, %arg5: memref<16x32xbf16, #tpu.memory_space<vmem>>, %arg6: memref<32x32xbf16, #tpu.memory_space<vmem>>, %arg7: memref<32x32xf32, #tpu.memory_space<vmem>>) attributes {dimension_semantics = [#tpu.dimension_semantics<parallel>], iteration_bounds = array<i64: 4>, scalar_prefetch = 0 : i64, scratch_operands = 0 : i64, tpu.core_type = #tpu.core_type<tc>, window_params = [{transform_indices = @transform_0, window_bounds = array<i64: 32, 2>}, {transform_indices = @transform_1, window_bounds = array<i64: 32, 16>}, {pipeline_mode = #tpu.pipeline_mode<synchronous>, transform_indices = @transform_2, window_bounds = array<i64: 16, 16>}, {pipeline_mode = #tpu.pipeline_mode<synchronous>, transform_indices = @transform_3, window_bounds = array<i64: 2, 32>}, {pipeline_mode = #tpu.pipeline_mode<synchronous>, transform_indices = @transform_4, window_bounds = array<i64: 16, 32>}, {pipeline_mode = #tpu.pipeline_mode<synchronous>, transform_indices = @transform_5, window_bounds = array<i64: 32, 32>}, {transform_indices = @transform_6, window_bounds = array<i64: 32, 32>}]} {
    %c0 = arith.constant 0 : index
    %c0_0 = arith.constant 0 : index
    %0 = vector.load %arg1[%c0, %c0_0] : memref<32x2xi32, #tpu.memory_space<vmem>>, vector<32x2xi32>
    %1 = vector.extract_strided_slice %0 {offsets = [0, 0], sizes = [32, 1], strides = [1, 1]} : vector<32x2xi32> to vector<32x1xi32>
    %2 = vector.extract_strided_slice %0 {offsets = [0, 1], sizes = [32, 1], strides = [1, 1]} : vector<32x2xi32> to vector<32x1xi32>
    %c0_1 = arith.constant 0 : index
    %c0_2 = arith.constant 0 : index
    %3 = vector.load %arg3[%c0_1, %c0_2] : memref<16x16xf32, #tpu.memory_space<vmem>>, vector<16x16xf32>
    %4 = tpu.iota {dimensions = array<i32: 1>} : vector<32x16xi32>
    %5 = vector.broadcast %1 : vector<32x1xi32> to vector<32x16xi32>
    %6 = arith.cmpi eq, %4, %5 : vector<32x16xi32>
    %7 = arith.extui %6 : vector<32x16xi1> to vector<32x16xi32>
    %8 = arith.sitofp %7 : vector<32x16xi32> to vector<32x16xf32>
    %9 = vector.broadcast %2 : vector<32x1xi32> to vector<32x16xi32>
    %10 = arith.cmpi eq, %4, %9 : vector<32x16xi32>
    %11 = arith.extui %10 : vector<32x16xi1> to vector<32x16xi32>
    %12 = arith.sitofp %11 : vector<32x16xi32> to vector<32x16xf32>
    %13 = arith.addf %8, %12 : vector<32x16xf32>
    %cst = arith.constant dense<0.000000e+00> : vector<32x16xf32>
    %14 = tpu.matmul %13, %3, %cst {dimension_numbers = #tpu.dot_dimension_numbers<[1], [0], [0], [1], [0, 0, 1, 1], [], []>} : vector<32x16xf32>, vector<16x16xf32>, vector<32x16xf32> -> vector<32x16xf32>
    %c0_3 = arith.constant 0 : index
    %c0_4 = arith.constant 0 : index
    %15 = vector.load %arg2[%c0_3, %c0_4] : memref<32x16xf32, #tpu.memory_space<vmem>>, vector<32x16xf32>
    %16 = arith.addf %14, %15 : vector<32x16xf32>
    %c0_5 = arith.constant 0 : index
    %c0_6 = arith.constant 0 : index
    %17 = vector.load %arg5[%c0_5, %c0_6] : memref<16x32xbf16, #tpu.memory_space<vmem>>, vector<16x32xbf16>
    %c0_7 = arith.constant 0 : index
    %c0_8 = arith.constant 0 : index
    %18 = vector.load %arg4[%c0_7, %c0_8] : memref<2x32xf32, #tpu.memory_space<vmem>>, vector<1x32xf32>
    %19 = arith.truncf %16 : vector<32x16xf32> to vector<32x16xbf16>
    %cst_9 = arith.constant dense<0.000000e+00> : vector<32x32xf32>
    %20 = tpu.matmul %19, %17, %cst_9 {dimension_numbers = #tpu.dot_dimension_numbers<[1], [0], [0], [1], [0, 0, 1, 1], [], []>} : vector<32x16xbf16>, vector<16x32xbf16>, vector<32x32xf32> -> vector<32x32xf32>
    %21 = vector.broadcast %18 : vector<1x32xf32> to vector<32x32xf32>
    %22 = arith.addf %20, %21 : vector<32x32xf32>
    %23 = math.tanh %22 : vector<32x32xf32>
    %c0_10 = arith.constant 0 : index
    %c0_11 = arith.constant 0 : index
    %24 = vector.load %arg6[%c0_10, %c0_11] : memref<32x32xbf16, #tpu.memory_space<vmem>>, vector<32x32xbf16>
    %c1 = arith.constant 1 : index
    %c0_12 = arith.constant 0 : index
    %25 = vector.load %arg4[%c1, %c0_12] : memref<2x32xf32, #tpu.memory_space<vmem>>, vector<1x32xf32>
    %26 = arith.truncf %23 : vector<32x32xf32> to vector<32x32xbf16>
    %cst_13 = arith.constant dense<0.000000e+00> : vector<32x32xf32>
    %27 = tpu.matmul %26, %24, %cst_13 {dimension_numbers = #tpu.dot_dimension_numbers<[1], [0], [0], [1], [0, 0, 1, 1], [], []>} : vector<32x32xbf16>, vector<32x32xbf16>, vector<32x32xf32> -> vector<32x32xf32>
    %28 = vector.broadcast %25 : vector<1x32xf32> to vector<32x32xf32>
    %29 = arith.addf %27, %28 : vector<32x32xf32>
    %c0_14 = arith.constant 0 : index
    %c0_15 = arith.constant 0 : index
    %30 = vector.load %arg7[%c0_14, %c0_15] : memref<32x32xf32, #tpu.memory_space<vmem>>, vector<32x32xf32>
    tpu.vector_store %arg7[%c0_14, %c0_15], %29 {strides = array<i32>} : memref<32x32xf32, #tpu.memory_space<vmem>>, vector<32x32xf32>,
    return
  }
  func.func @transform_0(%arg0: i32) -> (i32, i32) {
    %c0_i32 = arith.constant 0 : i32
    %c0_i32_0 = arith.constant 0 : i32
    return %arg0, %c0_i32 : i32, i32
  }
  func.func @transform_1(%arg0: i32) -> (i32, i32) {
    %c0_i32 = arith.constant 0 : i32
    %c0_i32_0 = arith.constant 0 : i32
    return %arg0, %c0_i32 : i32, i32
  }
  func.func @transform_2(%arg0: i32) -> (i32, i32) {
    %c0_i32 = arith.constant 0 : i32
    %c0_i32_0 = arith.constant 0 : i32
    %c0_i32_1 = arith.constant 0 : i32
    return %c0_i32, %c0_i32_0 : i32, i32
  }
  func.func @transform_3(%arg0: i32) -> (i32, i32) {
    %c0_i32 = arith.constant 0 : i32
    %c0_i32_0 = arith.constant 0 : i32
    %c0_i32_1 = arith.constant 0 : i32
    return %c0_i32, %c0_i32_0 : i32, i32
  }
  func.func @transform_4(%arg0: i32) -> (i32, i32) {
    %c0_i32 = arith.constant 0 : i32
    %c0_i32_0 = arith.constant 0 : i32
    %c0_i32_1 = arith.constant 0 : i32
    return %c0_i32, %c0_i32_0 : i32, i32
  }
  func.func @transform_5(%arg0: i32) -> (i32, i32) {
    %c0_i32 = arith.constant 0 : i32
    %c0_i32_0 = arith.constant 0 : i32
    %c0_i32_1 = arith.constant 0 : i32
    return %c0_i32, %c0_i32_0 : i32, i32
  }
  func.func @transform_6(%arg0: i32) -> (i32, i32) {
    %c0_i32 = arith.constant 0 : i32
    %c0_i32_0 = arith.constant 0 : i32
    return %arg0, %c0_i32 : i32, i32
  }
}

module attributes {stable_mosaic.version = 11 : i64} {
  func.func @kernel(%arg0: i32, %arg1: memref<32x2xi32, #tpu.memory_space<vmem>>, %arg2: memref<32x16xf32, #tpu.memory_space<vmem>>, %arg3: memref<16x16xf32, #tpu.memory_space<vmem>>, %arg4: memref<2x32xf32, #tpu.memory_space<vmem>>, %arg5: memref<16x32xbf16, #tpu.memory_space<vmem>>, %arg6: memref<32x32xbf16, #tpu.memory_space<vmem>>, %arg7: memref<32x32xf32, #tpu.memory_space<vmem>>) attributes {dimension_semantics = [#tpu.dimension_semantics<parallel>], iteration_bounds = array<i64: 4>, scalar_prefetch = 0 : i64, scratch_operands = 0 : i64, tpu.core_type = #tpu.core_type<tc>, window_params = [{transform_indices = @transform_0, window_bounds = array<i64: 32, 2>}, {transform_indices = @transform_1, window_bounds = array<i64: 32, 16>}, {pipeline_mode = #tpu.pipeline_mode<synchronous>, transform_indices = @transform_2, window_bounds = array<i64: 16, 16>}, {pipeline_mode = #tpu.pipeline_mode<synchronous>, transform_indices = @transform_3, window_bounds = array<i64: 2, 32>}, {pipeline_mode = #tpu.pipeline_mode<synchronous>, transform_indices = @transform_4, window_bounds = array<i64: 16, 32>}, {pipeline_mode = #tpu.pipeline_mode<synchronous>, transform_indices = @transform_5, window_bounds = array<i64: 32, 32>}, {transform_indices = @transform_6, window_bounds = array<i64: 32, 32>}]} {
    %c0 = arith.constant 0 : index
    %c0_0 = arith.constant 0 : index
    %0 = vector.load %arg1[%c0, %c0_0] : memref<32x2xi32, #tpu.memory_space<vmem>>, vector<32x2xi32>
    %1 = vector.extract_strided_slice %0 {offsets = [0, 0], sizes = [32, 1], strides = [1, 1]} : vector<32x2xi32> to vector<32x1xi32>
    %2 = vector.extract_strided_slice %0 {offsets = [0, 1], sizes = [32, 1], strides = [1, 1]} : vector<32x2xi32> to vector<32x1xi32>
    %c0_1 = arith.constant 0 : index
    %c0_2 = arith.constant 0 : index
    %3 = vector.load %arg3[%c0_1, %c0_2] : memref<16x16xf32, #tpu.memory_space<vmem>>, vector<16x16xf32>
    %4 = tpu.iota {dimensions = array<i32: 1>} : vector<32x16xi32>
    %5 = vector.broadcast %1 : vector<32x1xi32> to vector<32x16xi32>
    %6 = arith.cmpi eq, %4, %5 : vector<32x16xi32>
    %7 = arith.extui %6 : vector<32x16xi1> to vector<32x16xi32>
    %8 = arith.sitofp %7 : vector<32x16xi32> to vector<32x16xf32>
    %9 = vector.broadcast %2 : vector<32x1xi32> to vector<32x16xi32>
    %10 = arith.cmpi eq, %4, %9 : vector<32x16xi32>
    %11 = arith.extui %10 : vector<32x16xi1> to vector<32x16xi32>
    %12 = arith.sitofp %11 : vector<32x16xi32> to vector<32x16xf32>
    %13 = arith.addf %8, %12 : vector<32x16xf32>
    %cst = arith.constant dense<0.000000e+00> : vector<32x16xf32>
    %14 = tpu.matmul %13, %3, %cst {dimension_numbers = #tpu.dot_dimension_numbers<[1], [0], [0], [1], [0, 0, 1, 1], [], []>} : vector<32x16xf32>, vector<16x16xf32>, vector<32x16xf32> -> vector<32x16xf32>
    %c0_3 = arith.constant 0 : index
    %c0_4 = arith.constant 0 : index
    %15 = vector.load %arg2[%c0_3, %c0_4] : memref<32x16xf32, #tpu.memory_space<vmem>>, vector<32x16xf32>
    %16 = arith.addf %14, %15 : vector<32x16xf32>
    %c0_5 = arith.constant 0 : index
    %c0_6 = arith.constant 0 : index
    %17 = vector.load %arg5[%c0_5, %c0_6] : memref<16x32xbf16, #tpu.memory_space<vmem>>, vector<16x32xbf16>
    %c0_7 = arith.constant 0 : index
    %c0_8 = arith.constant 0 : index
    %18 = vector.load %arg4[%c0_7, %c0_8] : memref<2x32xf32, #tpu.memory_space<vmem>>, vector<1x32xf32>
    %19 = arith.truncf %16 : vector<32x16xf32> to vector<32x16xbf16>
    %cst_9 = arith.constant dense<0.000000e+00> : vector<32x32xf32>
    %20 = tpu.matmul %19, %17, %cst_9 {dimension_numbers = #tpu.dot_dimension_numbers<[1], [0], [0], [1], [0, 0, 1, 1], [], []>} : vector<32x16xbf16>, vector<16x32xbf16>, vector<32x32xf32> -> vector<32x32xf32>
    %21 = vector.broadcast %18 : vector<1x32xf32> to vector<32x32xf32>
    %22 = arith.addf %20, %21 : vector<32x32xf32>
    %23 = math.tanh %22 : vector<32x32xf32>
    %c0_10 = arith.constant 0 : index
    %c0_11 = arith.constant 0 : index
    %24 = vector.load %arg6[%c0_10, %c0_11] : memref<32x32xbf16, #tpu.memory_space<vmem>>, vector<32x32xbf16>
    %c1 = arith.constant 1 : index
    %c0_12 = arith.constant 0 : index
    %25 = vector.load %arg4[%c1, %c0_12] : memref<2x32xf32, #tpu.memory_space<vmem>>, vector<1x32xf32>
    %26 = arith.truncf %23 : vector<32x32xf32> to vector<32x32xbf16>
    %cst_13 = arith.constant dense<0.000000e+00> : vector<32x32xf32>
    %27 = tpu.matmul %26, %24, %cst_13 {dimension_numbers = #tpu.dot_dimension_numbers<[1], [0], [0], [1], [0, 0, 1, 1], [], []>} : vector<32x32xbf16>, vector<32x32xbf16>, vector<32x32xf32> -> vector<32x32xf32>
    %28 = vector.broadcast %25 : vector<1x32xf32> to vector<32x32xf32>
    %29 = arith.addf %27, %28 : vector<32x32xf32>
    %c0_14 = arith.constant 0 : index
    %c0_15 = arith.constant 0 : index
    %30 = vector.load %arg7[%c0_14, %c0_15] : memref<32x32xf32, #tpu.memory_space<vmem>>, vector<32x32xf32>
    tpu.vector_store %arg7[%c0_14, %c0_15], %29 {strides = array<i32>} : memref<32x32xf32, #tpu.memory_space<vmem>>, vector<32x32xf32>,
    return
  }
  func.func @transform_0(%arg0: i32) -> (i32, i32) {
    %c0_i32 = arith.constant 0 : i32
    %c0_i32_0 = arith.constant 0 : i32
    return %arg0, %c0_i32 : i32, i32
  }
  func.func @transform_1(%arg0: i32) -> (i32, i32) {
    %c0_i32 = arith.constant 0 : i32
    %c0_i32_0 = arith.constant 0 : i32
    return %arg0, %c0_i32 : i32, i32
  }
  func.func @transform_2(%arg0: i32) -> (i32, i32) {
    %c0_i32 = arith.constant 0 : i32
    %c0_i32_0 = arith.constant 0 : i32
    %c0_i32_1 = arith.constant 0 : i32
    return %c0_i32, %c0_i32_0 : i32, i32
  }
  func.func @transform_3(%arg0: i32) -> (i32, i32) {
    %c0_i32 = arith.constant 0 : i32
    %c0_i32_0 = arith.constant 0 : i32
    %c0_i32_1 = arith.constant 0 : i32
    return %c0_i32, %c0_i32_0 : i32, i32
  }
  func.func @transform_4(%arg0: i32) -> (i32, i32) {
    %c0_i32 = arith.constant 0 : i32
    %c0_i32_0 = arith.constant 0 : i32
    %c0_i32_1 = arith.constant 0 : i32
    return %c0_i32, %c0_i32_0 : i32, i32
  }
  func.func @transform_5(%arg0: i32) -> (i32, i32) {
    %c0_i32 = arith.constant 0 : i32
    %c0_i32_0 = arith.constant 0 : i32
    %c0_i32_1 = arith.constant 0 : i32
    return %c0_i32, %c0_i32_0 : i32, i32
  }
  func.func @transform_6(%arg0: i32) -> (i32, i32) {
    %c0_i32 = arith.constant 0 : i32
    %c0_i32_0 = arith.constant 0 : i32
    return %arg0, %c0_i32 : i32, i32
  }
}

</mosaic_0001>

<llo_original>
// kernel: tpu_custom_call.1
$region0: #{tpu_custom_call.1}
  #allocation0 [shape = 'u32[]', space=smem, size = 0x4, offset = 0x4, fixed_abs, tag = 'smem constant byte address 0x4 - core index']
  #allocation1 [shape = 'u32[144,128]{1,0:T(1,128)}', space=vmem, size = 0x12000, scoped, tag = 'internal scratch']
  %s0 = inlined_call_operand.vmem [shape: s32[100,2], index: 0, kind: input, shape index: {}]
  %s1 = inlined_call_operand.vmem [shape: f32[100,16], index: 1, kind: input, shape index: {}]
  %s2 = inlined_call_operand.vmem [shape: f32[16,16], index: 2, kind: input, shape index: {}]
  %s3 = inlined_call_operand.vmem [shape: f32[2,32], index: 3, kind: input, shape index: {}]
  %s4 = inlined_call_operand.vmem [shape: bf16[16,32], index: 4, kind: input, shape index: {}]
  %s5 = inlined_call_operand.vmem [shape: bf16[32,32], index: 5, kind: input, shape index: {}]
  %s6 = inlined_call_operand.vmem [shape: f32[100,32], index: 6, kind: output, shape index: {}]
  %s7 = sld [smem:[#allocation0]]
  $region105: #{tpu_custom_call.1} parent=0
    _
  %s9 = ssub.s32 1, %s7
  %s10 = scalar_select 0, %s9, %s7
  $region1: #{tpu_custom_call.1} parent=0
    #allocation2 [shape = 'u8[32768]{0}', space=vmem, size = 0x8000, scoped, tag = 'output window, operand 0']
    loop: start=0, step=1, limit=6
    $region2: #{tpu_custom_call.1} parent=1 // loop_pre_header
      _
    $region3: #{tpu_custom_call.1} parent=1 // loop_header
      %s12 = sphi 0, %s16
      %p13 = scmp.ge.s32.totalorder %s12, 6
      %s22 = sphi 0, %s24
      %s25 = sphi 0, %s22
      %s26 = sphi 0, %s25
      %s42 = sphi 0, %s26
      %s48 = sphi 0, %s50
      %s51 = sphi 0, %s48
      %s52 = sphi 0, %s51
      %s68 = sphi 0, %s52
      %s72 = sphi 0, %s72
      %s74 = sphi 0, %s72
      %s75 = sphi 0, %s74
      %s89 = sphi 0, %s75
      %s93 = sphi 0, %s93
      %s95 = sphi 0, %s93
      %s96 = sphi 0, %s95
      %s110 = sphi 0, %s96
      %s114 = sphi 0, %s114
      %s116 = sphi 0, %s114
      %s117 = sphi 0, %s116
      %s131 = sphi 0, %s117
      %s135 = sphi 0, %s135
      %s137 = sphi 0, %s135
      %s138 = sphi 0, %s137
      %s152 = sphi 0, %s138
      %s158 = sphi 0, %s160
      %s161 = sphi 0, %s158
      %s162 = sphi 0, %s161
      %s178 = sphi 0, %s162
    $region4: #{tpu_custom_call.1} parent=1 // loop_header_branch
      %15 = sbr.rel (%p13) target = $region8
    $region5: #{tpu_custom_call.1} parent=1 // loop_body
      %s17 = ssub.s32 %s12, 1
      %s18 = ssub.s32 %s12, 2
      %s19 = sadd.s32 %s12, 1
      %s20 = ssub.s32 %s12, %s19
      %p21 = scmp.eq.s32.totalorder %s20, 0
      %s23 = sadd.s32 %s22, 1
      %s24 = scalar_select %p21, %s22, %s23
      %p27 = pneg %p21
      %p28 = scmp.eq.s32.totalorder %s12, 3
      %p29 = por %p27, %p28
      %p30 = scmp.ne.s32.totalorder %s22, %s25
      %p31 = scmp.eq.s32.totalorder %s12, 0
      %p32 = por %p30, %p31
      %p33 = scmp.ne.s32.totalorder %s22, %s25
      %p34 = scmp.eq.s32.totalorder %s17, 3
      %p35 = por %p33, %p34
      %p36 = scmp.ne.s32.totalorder %s25, %s26
      %p37 = scmp.eq.s32.totalorder %s17, 0
      %p38 = por %p36, %p37
      %p39 = scmp.ne.s32.totalorder %s25, %s26
      %p40 = scmp.eq.s32.totalorder %s18, 3
      %p41 = por %p39, %p40
      %p43 = scmp.ne.s32.totalorder %s26, %s42
      %p44 = scmp.eq.s32.totalorder %s18, 0
      %p45 = por %p43, %p44
      %s46 = ssub.s32 %s12, %s19
      %p47 = scmp.eq.s32.totalorder %s46, 0
      %s49 = sadd.s32 %s48, 1
      %s50 = scalar_select %p47, %s48, %s49
      %p53 = pneg %p47
      %p54 = scmp.eq.s32.totalorder %s12, 3
      %p55 = por %p53, %p54
      %p56 = scmp.ne.s32.totalorder %s48, %s51
      %p57 = scmp.eq.s32.totalorder %s12, 0
      %p58 = por %p56, %p57
      %p59 = scmp.ne.s32.totalorder %s48, %s51
      %p60 = scmp.eq.s32.totalorder %s17, 3
      %p61 = por %p59, %p60
      %p62 = scmp.ne.s32.totalorder %s51, %s52
      %p63 = scmp.eq.s32.totalorder %s17, 0
      %p64 = por %p62, %p63
      %p65 = scmp.ne.s32.totalorder %s51, %s52
      %p66 = scmp.eq.s32.totalorder %s18, 3
      %p67 = por %p65, %p66
      %p69 = scmp.ne.s32.totalorder %s52, %s68
      %p70 = scmp.eq.s32.totalorder %s18, 0
      %p71 = por %p69, %p70
      %s73 = sadd.s32 %s72, 1
      %p76 = scmp.eq.s32.totalorder %s12, 3
      %p77 = scmp.ne.s32.totalorder %s72, %s74
      %p78 = scmp.eq.s32.totalorder %s12, 0
      %p79 = por %p77, %p78
      %p80 = scmp.ne.s32.totalorder %s72, %s74
      %p81 = scmp.eq.s32.totalorder %s17, 3
      %p82 = por %p80, %p81
      %p83 = scmp.ne.s32.totalorder %s74, %s75
      %p84 = scmp.eq.s32.totalorder %s17, 0
      %p85 = por %p83, %p84
      %p86 = scmp.ne.s32.totalorder %s74, %s75
      %p87 = scmp.eq.s32.totalorder %s18, 3
      %p88 = por %p86, %p87
      %p90 = scmp.ne.s32.totalorder %s75, %s89
      %p91 = scmp.eq.s32.totalorder %s18, 0
      %p92 = por %p90, %p91
      %s94 = sadd.s32 %s93, 1
      %p97 = scmp.eq.s32.totalorder %s12, 3
      %p98 = scmp.ne.s32.totalorder %s93, %s95
      %p99 = scmp.eq.s32.totalorder %s12, 0
      %p100 = por %p98, %p99
      %p101 = scmp.ne.s32.totalorder %s93, %s95
      %p102 = scmp.eq.s32.totalorder %s17, 3
      %p103 = por %p101, %p102
      %p104 = scmp.ne.s32.totalorder %s95, %s96
      %p105 = scmp.eq.s32.totalorder %s17, 0
      %p106 = por %p104, %p105
      %p107 = scmp.ne.s32.totalorder %s95, %s96
      %p108 = scmp.eq.s32.totalorder %s18, 3
      %p109 = por %p107, %p108
      %p111 = scmp.ne.s32.totalorder %s96, %s110
      %p112 = scmp.eq.s32.totalorder %s18, 0
      %p113 = por %p111, %p112
      %s115 = sadd.s32 %s114, 1
      %p118 = scmp.eq.s32.totalorder %s12, 3
      %p119 = scmp.ne.s32.totalorder %s114, %s116
      %p120 = scmp.eq.s32.totalorder %s12, 0
      %p121 = por %p119, %p120
      %p122 = scmp.ne.s32.totalorder %s114, %s116
      %p123 = scmp.eq.s32.totalorder %s17, 3
      %p124 = por %p122, %p123
      %p125 = scmp.ne.s32.totalorder %s116, %s117
      %p126 = scmp.eq.s32.totalorder %s17, 0
      %p127 = por %p125, %p126
      %p128 = scmp.ne.s32.totalorder %s116, %s117
      %p129 = scmp.eq.s32.totalorder %s18, 3
      %p130 = por %p128, %p129
      %p132 = scmp.ne.s32.totalorder %s117, %s131
      %p133 = scmp.eq.s32.totalorder %s18, 0
      %p134 = por %p132, %p133
      %s136 = sadd.s32 %s135, 1
      %p139 = scmp.eq.s32.totalorder %s12, 3
      %p140 = scmp.ne.s32.totalorder %s135, %s137
      %p141 = scmp.eq.s32.totalorder %s12, 0
      %p142 = por %p140, %p141
      %p143 = scmp.ne.s32.totalorder %s135, %s137
      %p144 = scmp.eq.s32.totalorder %s17, 3
      %p145 = por %p143, %p144
      %p146 = scmp.ne.s32.totalorder %s137, %s138
      %p147 = scmp.eq.s32.totalorder %s17, 0
      %p148 = por %p146, %p147
      %p149 = scmp.ne.s32.totalorder %s137, %s138
      %p150 = scmp.eq.s32.totalorder %s18, 3
      %p151 = por %p149, %p150
      %p153 = scmp.ne.s32.totalorder %s138, %s152
      %p154 = scmp.eq.s32.totalorder %s18, 0
      %p155 = por %p153, %p154
      %s156 = ssub.s32 %s12, %s19
      %p157 = scmp.eq.s32.totalorder %s156, 0
      %s159 = sadd.s32 %s158, 1
      %s160 = scalar_select %p157, %s158, %s159
      %p163 = pneg %p157
      %p164 = scmp.eq.s32.totalorder %s12, 3
      %p165 = por %p163, %p164
      %p166 = scmp.ne.s32.totalorder %s158, %s161
      %p167 = scmp.eq.s32.totalorder %s12, 0
      %p168 = por %p166, %p167
      %p169 = scmp.ne.s32.totalorder %s158, %s161
      %p170 = scmp.eq.s32.totalorder %s17, 3
      %p171 = por %p169, %p170
      %p172 = scmp.ne.s32.totalorder %s161, %s162
      %p173 = scmp.eq.s32.totalorder %s17, 0
      %p174 = por %p172, %p173
      %p175 = scmp.ne.s32.totalorder %s161, %s162
      %p176 = scmp.eq.s32.totalorder %s18, 3
      %p177 = por %p175, %p176
      %p179 = scmp.ne.s32.totalorder %s162, %s178
      %p180 = scmp.eq.s32.totalorder %s18, 0
      %p181 = por %p179, %p180
      %p182 = scmp.le.s32.totalorder 1, %s12
      %p183 = scmp.lt.s32.totalorder %s12, 5
      %p184 = pnand %p182, %p183
      %p185 = pneg %p184
      // Predicated region
      $region9: #{tpu_custom_call.1} parent=5 // pred_check
        _
      $region10: #{tpu_custom_call.1} parent=5 // pred_check_branch
        %187 = sbr.rel (%p184) target = $region12
      $region11: #{tpu_custom_call.1} parent=5 // pred_region
        %s188 = ssub.s32 %s12, 1
        // Predicated region
        $region13: #{tpu_custom_call.1} parent=11 // pred_check
          %p189 = pneg %p85
        $region14: #{tpu_custom_call.1} parent=11 // pred_check_branch
          %191 = sbr.rel (%p189) target = $region16
        $region15: #{tpu_custom_call.1} parent=11 // pred_region
          _
        $region16: #{tpu_custom_call.1} parent=11 // pred_fallthru
          _
        // Predicated region
        $region17: #{tpu_custom_call.1} parent=11 // pred_check
          %p192 = pneg %p106
        $region18: #{tpu_custom_call.1} parent=11 // pred_check_branch
          %194 = sbr.rel (%p192) target = $region20
        $region19: #{tpu_custom_call.1} parent=11 // pred_region
          _
        $region20: #{tpu_custom_call.1} parent=11 // pred_fallthru
          _
        // Predicated region
        $region21: #{tpu_custom_call.1} parent=11 // pred_check
          %p195 = pneg %p127
        $region22: #{tpu_custom_call.1} parent=11 // pred_check_branch
          %197 = sbr.rel (%p195) target = $region24
        $region23: #{tpu_custom_call.1} parent=11 // pred_region
          _
        $region24: #{tpu_custom_call.1} parent=11 // pred_fallthru
          _
        // Predicated region
        $region25: #{tpu_custom_call.1} parent=11 // pred_check
          %p198 = pneg %p148
        $region26: #{tpu_custom_call.1} parent=11 // pred_check_branch
          %200 = sbr.rel (%p198) target = $region28
        $region27: #{tpu_custom_call.1} parent=11 // pred_region
          _
        $region28: #{tpu_custom_call.1} parent=11 // pred_fallthru
          _
      $region12: #{tpu_custom_call.1} parent=5 // pred_fallthru
        _
      %p201 = scmp.lt.s32.totalorder %s12, 4
      // Predicated region
      $region29: #{tpu_custom_call.1} parent=5 // pred_check
        %p202 = pneg %p201
      $region30: #{tpu_custom_call.1} parent=5 // pred_check_branch
        %204 = sbr.rel (%p202) target = $region32
      $region31: #{tpu_custom_call.1} parent=5 // pred_region
        // Predicated region
        $region33: #{tpu_custom_call.1} parent=31 // pred_check
          %p205 = pneg %p32
        $region34: #{tpu_custom_call.1} parent=31 // pred_check_branch
          %207 = sbr.rel (%p205) target = $region36
        $region35: #{tpu_custom_call.1} parent=31 // pred_region
          %s208 = smul.u32 4, %s12
          %s209 = ssub.s32 13, %s208
          %p210 = scmp.lt.s32.totalorder %s209, 4
          %s211 = scalar_select %p210, %s209, 4
          %s212 = smul.u32 128, %s211
          %p213 = scmp.lt.s32.totalorder %s208, 12
          %s214 = scalar_select %p213, %s208, 12
          %s215 = smul.addr %s214, 8
          %s216 = scalar_lea.vmem %s0, %s215
          %s217 = smul.u32 4, %s12
          %s218 = ssub.s32 13, %s217
          %p219 = scmp.lt.s32.totalorder %s218, 4
          %s220 = scalar_select %p219, %s218, 4
          %s221 = smul.u32 128, %s220
        $region36: #{tpu_custom_call.1} parent=31 // pred_fallthru
          _
        // Predicated region
        $region37: #{tpu_custom_call.1} parent=31 // pred_check
          %p222 = pneg %p58
        $region38: #{tpu_custom_call.1} parent=31 // pred_check_branch
          %224 = sbr.rel (%p222) target = $region40
        $region39: #{tpu_custom_call.1} parent=31 // pred_region
          %s225 = smul.u32 4, %s12
          %s226 = ssub.s32 13, %s225
          %p227 = scmp.lt.s32.totalorder %s226, 4
          %s228 = scalar_select %p227, %s226, 4
          %s229 = smul.u32 128, %s228
          %p230 = scmp.lt.s32.totalorder %s225, 12
          %s231 = scalar_select %p230, %s225, 12
          %s232 = smul.addr %s231, 8
          %s233 = scalar_lea.vmem %s1, %s232
          %s234 = smul.u32 4, %s12
          %s235 = ssub.s32 13, %s234
          %p236 = scmp.lt.s32.totalorder %s235, 4
          %s237 = scalar_select %p236, %s235, 4
          %s238 = smul.u32 128, %s237
        $region40: #{tpu_custom_call.1} parent=31 // pred_fallthru
          _
      $region32: #{tpu_custom_call.1} parent=5 // pred_fallthru
        _
      %p239 = scmp.le.s32.totalorder 1, %s12
      %p240 = scmp.lt.s32.totalorder %s12, 5
      %p241 = pnand %p239, %p240
      %p242 = pneg %p241
      // Predicated region
      $region41: #{tpu_custom_call.1} parent=5 // pred_check
        _
      $region42: #{tpu_custom_call.1} parent=5 // pred_check_branch
        %244 = sbr.rel (%p241) target = $region44
      $region43: #{tpu_custom_call.1} parent=5 // pred_region
        %s245 = ssub.s32 %s12, 1
        %s246 = smul.u32 4, %s17
        %s247 = ssub.s32 13, %s246
        %p248 = scmp.lt.s32.totalorder %s247, 4
        %s249 = scalar_select %p248, %s247, 4
        %s250 = smul.u32 128, %s249
        %p251 = scmp.lt.s32.totalorder %s246, 12
        %s252 = scalar_select %p251, %s246, 12
        %s253 = smul.addr %s252, 8
        %s254 = scalar_lea.vmem %s0, %s253
        %p255 = pneg %p38
        %p256 = pneg %p35
        %s257 = smul.u32 4, %s17
        %s258 = ssub.s32 13, %s257
        %p259 = scmp.lt.s32.totalorder %s258, 4
        %s260 = scalar_select %p259, %s258, 4
        %s261 = smul.u32 128, %s260
        %p262 = scmp.lt.s32.totalorder %s257, 12
        %s263 = scalar_select %p262, %s257, 12
        %s264 = smul.addr %s263, 8
        %s265 = scalar_lea.vmem %s1, %s264
        %p266 = pneg %p64
        %p267 = pneg %p61
        %p268 = pneg %p85
        %p269 = pneg %p82
        %p270 = pneg %p106
        %p271 = pneg %p103
        %p272 = pneg %p127
        %p273 = pneg %p124
        %p274 = pneg %p148
        %p275 = pneg %p145
        %p276 = pneg %p174
        %p277 = pneg %p171
        %s278 = sand.u32 %s161, 1
        %s279 = sand.u32 %s161, 1
        %s280 = smul.addr %s279, 32
        %s281 = scalar_lea.vmem [#allocation2], %s280
        %s282 = smul.u32 4, %s17
        %s283 = ssub.s32 13, %s282
        %p284 = scmp.lt.s32.totalorder %s283, 4
        %s285 = scalar_select %p284, %s283, 4
        %s286 = smul.u32 128, %s285
        %p287 = scmp.lt.s32.totalorder %s282, 12
        %s288 = scalar_select %p287, %s282, 12
        %s289 = smul.addr %s288, 8
        %s290 = scalar_lea.vmem %s0, %s289
        %s291 = smul.u32 4, %s17
        %s292 = ssub.s32 13, %s291
        %p293 = scmp.lt.s32.totalorder %s292, 4
        %s294 = scalar_select %p293, %s292, 4
        %s295 = smul.u32 128, %s294
        %s296 = smul.u32 4, %s17
        %s297 = ssub.s32 13, %s296
        %p298 = scmp.lt.s32.totalorder %s297, 4
        %s299 = scalar_select %p298, %s297, 4
        %s300 = smul.u32 128, %s299
        %p301 = scmp.lt.s32.totalorder %s296, 12
        %s302 = scalar_select %p301, %s296, 12
        %s303 = smul.addr %s302, 8
        %s304 = scalar_lea.vmem %s1, %s303
        %s305 = smul.u32 4, %s17
        %s306 = ssub.s32 13, %s305
        %p307 = scmp.lt.s32.totalorder %s306, 4
        %s308 = scalar_select %p307, %s306, 4
        %s309 = smul.u32 128, %s308
        %s310 = smul.u32 4, %s17
        %s311 = ssub.s32 13, %s310
        %p312 = scmp.lt.s32.totalorder %s311, 4
        %s313 = scalar_select %p312, %s311, 4
        %s314 = smul.u32 128, %s313
        %v316 = vld [vmem:[%s290] sm:$0xff]
        %v317 = vld [vmem:[%s290 + $0x8] sm:$0xff]
        %v318 = vld [vmem:[%s290 + $0x10] sm:$0xff]
        %v319 = vld [vmem:[%s290 + $0x18] sm:$0xff]
        %v320 = vld [vmem:[%s2] sm:$0xff]
        %v321 = vld [vmem:[%s2 + $0x8] sm:$0xff]
        %v322 = vlaneseq
        %v323 = vand.u32 %v322, 127
        %324 = vset.pattern.permute.xlu0 0
        %325 = vperm.xlu0 %324, %v316
        %v326 = vpop.permute.xlu0 %325
        %327 = vset.pattern.permute.xlu0 0
        %328 = vperm.xlu0 %327, %v317
        %v329 = vpop.permute.xlu0 %328
        %330 = vset.pattern.permute.xlu0 0
        %331 = vperm.xlu0 %330, %v318
        %v332 = vpop.permute.xlu0 %331
        %333 = vset.pattern.permute.xlu0 0
        %334 = vperm.xlu0 %333, %v319
        %v335 = vpop.permute.xlu0 %334
        %vm336 = vcmp.eq.s32.totalorder %v323, %v326
        %vm337 = vcmp.eq.s32.totalorder %v323, %v329
        %vm338 = vcmp.eq.s32.totalorder %v323, %v332
        %vm339 = vcmp.eq.s32.totalorder %v323, %v335
        %v340 = vsel %vm336, 1, 0
        %v341 = vsel %vm337, 1, 0
        %v342 = vsel %vm338, 1, 0
        %v343 = vsel %vm339, 1, 0
        %v344 = vcvt.s32.f32 %v340
        %v345 = vcvt.s32.f32 %v341
        %v346 = vcvt.s32.f32 %v342
        %v347 = vcvt.s32.f32 %v343
        %348 = vset.pattern.permute.xlu0 1
        %349 = vperm.xlu0 %348, %v316
        %v350 = vpop.permute.xlu0 %349
        %351 = vset.pattern.permute.xlu0 1
        %352 = vperm.xlu0 %351, %v317
        %v353 = vpop.permute.xlu0 %352
        %354 = vset.pattern.permute.xlu0 1
        %355 = vperm.xlu0 %354, %v318
        %v356 = vpop.permute.xlu0 %355
        %357 = vset.pattern.permute.xlu0 1
        %358 = vperm.xlu0 %357, %v319
        %v359 = vpop.permute.xlu0 %358
        %vm360 = vcmp.eq.s32.totalorder %v323, %v350
        %vm361 = vcmp.eq.s32.totalorder %v323, %v353
        %vm362 = vcmp.eq.s32.totalorder %v323, %v356
        %vm363 = vcmp.eq.s32.totalorder %v323, %v359
        %v364 = vsel %vm360, 1, 0
        %v365 = vsel %vm361, 1, 0
        %v366 = vsel %vm362, 1, 0
        %v367 = vsel %vm363, 1, 0
        %v368 = vcvt.s32.f32 %v364
        %v369 = vcvt.s32.f32 %v365
        %v370 = vcvt.s32.f32 %v366
        %v371 = vcvt.s32.f32 %v367
        %v372 = vadd.f32 %v344, %v368
        %v373 = vadd.f32 %v345, %v369
        %v374 = vadd.f32 %v346, %v370
        %v375 = vadd.f32 %v347, %v371
        %v376 = vld [vmem:[%s304] sm:$0xff]
        %v377 = vld [vmem:[%s304 + $0x8] sm:$0xff]
        %v378 = vld [vmem:[%s304 + $0x10] sm:$0xff]
        %v379 = vld [vmem:[%s304 + $0x18] sm:$0xff]
        %vm380 = vcmask 130048
        %v382 = vsel %vm380, %v372, 0
        %v385 = vsel %vm380, %v373, 0
        %v388 = vsel %vm380, %v374, 0
        %v391 = vsel %vm380, %v375, 0
        %393 = vmatprep.subr.mxu0 0.0
        %394 = vmatpush1.msra.mxu0 %v320
        %395 = vmatprep.subr.mxu0 0.0
        %396 = vmatpush1.msra.mxu0 %v321
        %397 = vmatprep.subr.mxu0 0.0
        %398 = vmatpush1.msra.mxu0 0.0
        %399 = vmatprep.subr.mxu0 0.0
        %400 = vmatpush1.msra.mxu0 0.0
        %401 = vmatprep.subr.mxu0 0.0
        %402 = vmatpush1.msra.mxu0 0.0
        %403 = vmatprep.subr.mxu0 0.0
        %404 = vmatpush1.msra.mxu0 0.0
        %405 = vmatprep.subr.mxu0 0.0
        %406 = vmatpush1.msra.mxu0 0.0
        %407 = vmatprep.subr.mxu0 0.0
        %408 = vmatpush1.msra.mxu0 0.0
        %409 = vmatprep.subr.mxu0 0.0
        %410 = vmatpush1.msra.mxu0 0.0
        %411 = vmatprep.subr.mxu0 0.0
        %412 = vmatpush1.msra.mxu0 0.0
        %413 = vmatprep.subr.mxu0 0.0
        %414 = vmatpush1.msra.mxu0 0.0
        %415 = vmatprep.subr.mxu0 0.0
        %416 = vmatpush1.msra.mxu0 0.0
        %417 = vmatprep.subr.mxu0 0.0
        %418 = vmatpush1.msra.mxu0 0.0
        %419 = vmatprep.subr.mxu0 0.0
        %420 = vmatpush1.msra.mxu0 0.0
        %421 = vmatprep.subr.mxu0 0.0
        %422 = vmatpush1.msra.mxu0 0.0
        %423 = vmatprep.subr.mxu0 0.0
        %424 = vmatpush1.msra.mxu0 0.0
        %425 = vmatprep.subr.mxu0 0.0
        %426 = vmatpush1.msra.mxu0 0.0
        %427 = vmatprep.subr.mxu0 0.0
        %428 = vmatpush1.msra.mxu0 0.0
        %429 = vmatprep.subr.mxu0 0.0
        %430 = vmatpush1.msra.mxu0 0.0
        %431 = vmatprep.subr.mxu0 0.0
        %432 = vmatpush1.msra.mxu0 0.0
        %433 = vmatprep.subr.mxu0 0.0
        %434 = vmatpush1.msra.mxu0 0.0
        %435 = vmatprep.subr.mxu0 0.0
        %436 = vmatpush1.msra.mxu0 0.0
        %437 = vmatprep.subr.mxu0 0.0
        %438 = vmatpush1.msra.mxu0 0.0
        %439 = vmatprep.subr.mxu0 0.0
        %440 = vmatpush1.msra.mxu0 0.0
        %441 = vmatprep.subr.mxu0 0.0
        %442 = vmatpush1.msra.mxu0 0.0
        %443 = vmatprep.subr.mxu0 0.0
        %444 = vmatpush1.msra.mxu0 0.0
        %445 = vmatprep.subr.mxu0 0.0
        %446 = vmatpush1.msra.mxu0 0.0
        %447 = vmatprep.subr.mxu0 0.0
        %448 = vmatpush1.msra.mxu0 0.0
        %449 = vmatprep.subr.mxu0 0.0
        %450 = vmatpush1.msra.mxu0 0.0
        %451 = vmatprep.subr.mxu0 0.0
        %452 = vmatpush1.msra.mxu0 0.0
        %453 = vmatprep.subr.mxu0 0.0
        %454 = vmatpush1.msra.mxu0 0.0
        %455 = vmatprep.subr.mxu0 0.0
        %456 = vmatpush1.msra.mxu0 0.0
        %457 = vmatprep.mubr.f32.mxu0 0.0
        %458 = vmatmul.mubr.f32.gmra.mrb[0].mxu0 %v382
        %v459 = vpop.f32.mrb[0].mxu0
        %v460 = vadd.f32 %v376, %v459
        %v461 = vpop.f32.mrb[0].mxu0
        %462 = vmatprep.mubr.f32.mxu0 0.0
        %463 = vmatmul.mubr.f32.gmra.mrb[0].mxu0 %v385
        %v464 = vpop.f32.mrb[0].mxu0
        %v465 = vadd.f32 %v377, %v464
        %v466 = vpop.f32.mrb[0].mxu0
        %467 = vmatprep.mubr.f32.mxu0 0.0
        %468 = vmatmul.mubr.f32.gmra.mrb[0].mxu0 %v388
        %v469 = vpop.f32.mrb[0].mxu0
        %v470 = vadd.f32 %v378, %v469
        %v471 = vpop.f32.mrb[0].mxu0
        %472 = vmatprep.mubr.f32.mxu0 0.0
        %473 = vmatmul.mubr.f32.gmra.mrb[0].mxu0 %v391
        %v474 = vpop.f32.mrb[0].mxu0
        %v475 = vadd.f32 %v379, %v474
        %v476 = vpop.f32.mrb[0].mxu0
        %477 = vdwg.mxu0
        %v478 = vld [vmem:[%s4] sm:$0xf]
        %v479 = vld [vmem:[%s4 + $0x4] sm:$0xf]
        %v480 = vld [vmem:[%s3] sm:$0x1]
        %v481 = vpack.c.bf16 %v465, %v460
        %v482 = vpack.c.bf16 %v475, %v470
        %v483 = vlaneseq
        %v484 = vshrl.u32 %v483, 7
        %v485 = vsub.s32 0, %v484
        %v486 = vrot.slane %v480, %v485
        %v489 = vunpack.c.l.b16 %v478
        %v490 = vunpack.c.l.b16 %v479
        %v491 = vpack.c.b16 %v490, %v489
        %v494 = vsel %vm380, %v481, 0
        %v497 = vsel %vm380, %v482, 0
        %499 = vmatprep.subr.bf16.mxu0 0
        %500 = vmatpush1.bf16.msra.mxu0 %v491
        %501 = vmatprep.subr.bf16.mxu0 0
        %502 = vmatpush1.bf16.msra.mxu0 0
        %503 = vmatprep.subr.bf16.mxu0 0
        %504 = vmatpush1.bf16.msra.mxu0 0
        %505 = vmatprep.subr.bf16.mxu0 0
        %506 = vmatpush1.bf16.msra.mxu0 0
        %507 = vmatprep.subr.bf16.mxu0 0
        %508 = vmatpush1.bf16.msra.mxu0 0
        %509 = vmatprep.subr.bf16.mxu0 0
        %510 = vmatpush1.bf16.msra.mxu0 0
        %511 = vmatprep.subr.bf16.mxu0 0
        %512 = vmatpush1.bf16.msra.mxu0 0
        %513 = vmatprep.subr.bf16.mxu0 0
        %514 = vmatpush1.bf16.msra.mxu0 0
        %515 = vmatprep.subr.bf16.mxu0 0
        %516 = vmatpush1.bf16.msra.mxu0 0
        %517 = vmatprep.subr.bf16.mxu0 0
        %518 = vmatpush1.bf16.msra.mxu0 0
        %519 = vmatprep.subr.bf16.mxu0 0
        %520 = vmatpush1.bf16.msra.mxu0 0
        %521 = vmatprep.subr.bf16.mxu0 0
        %522 = vmatpush1.bf16.msra.mxu0 0
        %523 = vmatprep.subr.bf16.mxu0 0
        %524 = vmatpush1.bf16.msra.mxu0 0
        %525 = vmatprep.subr.bf16.mxu0 0
        %526 = vmatpush1.bf16.msra.mxu0 0
        %527 = vmatprep.subr.bf16.mxu0 0
        %528 = vmatpush1.bf16.msra.mxu0 0
        %529 = vmatprep.subr.bf16.mxu0 0
        %530 = vmatpush1.bf16.msra.mxu0 0
        %531 = vmatprep.mubr.bf16.mxu0 0
        %532 = vmatmul.mubr.bf16.gmra.mrb[0].mxu0 %v494
        %v533 = vpop.f32.mrb[0].mxu0
        %v534 = vadd.f32 %v486, %v533
        %v535 = vpop.f32.mrb[0].mxu0
        %v536 = vpop.f32.mrb[0].mxu0
        %v537 = vadd.f32 %v486, %v536
        %v538 = vpop.f32.mrb[0].mxu0
        %539 = vmatprep.mubr.bf16.mxu0 0
        %540 = vmatmul.mubr.bf16.gmra.mrb[0].mxu0 %v497
        %v541 = vpop.f32.mrb[0].mxu0
        %v542 = vadd.f32 %v486, %v541
        %v543 = vpop.f32.mrb[0].mxu0
        %v544 = vpop.f32.mrb[0].mxu0
        %v545 = vadd.f32 %v486, %v544
        %v546 = vpop.f32.mrb[0].mxu0
        %547 = vdwg.mxu0
        %v548 = vtanh.pop %v534
        %v549 = vtanh.pop %v537
        %v550 = vtanh.pop %v542
        %v551 = vtanh.pop %v545
        %v552 = vld [vmem:[%s5] sm:$0xf]
        %v553 = vld [vmem:[%s5 + $0x4] sm:$0xf]
        %v554 = vld [vmem:[%s5 + $0x8] sm:$0xf]
        %v555 = vld [vmem:[%s5 + $0xc] sm:$0xf]
        %v556 = vld [vmem:[%s3 + $0x1] sm:$0x1]
        %v557 = vpack.c.bf16 %v549, %v548
        %v558 = vpack.c.bf16 %v551, %v550
        %v559 = vlaneseq
        %v560 = vshrl.u32 %v559, 7
        %v561 = vsub.s32 0, %v560
        %v562 = vrot.slane %v556, %v561
        %v567 = vunpack.c.l.b16 %v552
        %v568 = vunpack.c.l.b16 %v553
        %v569 = vunpack.c.l.b16 %v554
        %v570 = vunpack.c.l.b16 %v555
        %v571 = vpack.c.b16 %v568, %v567
        %v572 = vpack.c.b16 %v570, %v569
        %vm575 = vcmask 261120
        %v577 = vsel %vm575, %v557, 0
        %v580 = vsel %vm575, %v558, 0
        %582 = vmatprep.subr.bf16.mxu0 0
        %583 = vmatpush1.bf16.msra.mxu0 %v571
        %584 = vmatprep.subr.bf16.mxu0 0
        %585 = vmatpush1.bf16.msra.mxu0 %v572
        %586 = vmatprep.subr.bf16.mxu0 0
        %587 = vmatpush1.bf16.msra.mxu0 0
        %588 = vmatprep.subr.bf16.mxu0 0
        %589 = vmatpush1.bf16.msra.mxu0 0
        %590 = vmatprep.subr.bf16.mxu0 0
        %591 = vmatpush1.bf16.msra.mxu0 0
        %592 = vmatprep.subr.bf16.mxu0 0
        %593 = vmatpush1.bf16.msra.mxu0 0
        %594 = vmatprep.subr.bf16.mxu0 0
        %595 = vmatpush1.bf16.msra.mxu0 0
        %596 = vmatprep.subr.bf16.mxu0 0
        %597 = vmatpush1.bf16.msra.mxu0 0
        %598 = vmatprep.subr.bf16.mxu0 0
        %599 = vmatpush1.bf16.msra.mxu0 0
        %600 = vmatprep.subr.bf16.mxu0 0
        %601 = vmatpush1.bf16.msra.mxu0 0
        %602 = vmatprep.subr.bf16.mxu0 0
        %603 = vmatpush1.bf16.msra.mxu0 0
        %604 = vmatprep.subr.bf16.mxu0 0
        %605 = vmatpush1.bf16.msra.mxu0 0
        %606 = vmatprep.subr.bf16.mxu0 0
        %607 = vmatpush1.bf16.msra.mxu0 0
        %608 = vmatprep.subr.bf16.mxu0 0
        %609 = vmatpush1.bf16.msra.mxu0 0
        %610 = vmatprep.subr.bf16.mxu0 0
        %611 = vmatpush1.bf16.msra.mxu0 0
        %612 = vmatprep.subr.bf16.mxu0 0
        %613 = vmatpush1.bf16.msra.mxu0 0
        %614 = vmatprep.mubr.bf16.mxu0 0
        %615 = vmatmul.mubr.bf16.gmra.mrb[0].mxu0 %v577
        %v616 = vpop.f32.mrb[0].mxu0
        %v617 = vadd.f32 %v562, %v616
        %v618 = vpop.f32.mrb[0].mxu0
        %v619 = vpop.f32.mrb[0].mxu0
        %v620 = vadd.f32 %v562, %v619
        %v621 = vpop.f32.mrb[0].mxu0
        %622 = vmatprep.mubr.bf16.mxu0 0
        %623 = vmatmul.mubr.bf16.gmra.mrb[0].mxu0 %v580
        %v624 = vpop.f32.mrb[0].mxu0
        %v625 = vadd.f32 %v562, %v624
        %v626 = vpop.f32.mrb[0].mxu0
        %v627 = vpop.f32.mrb[0].mxu0
        %v628 = vadd.f32 %v562, %v627
        %v629 = vpop.f32.mrb[0].mxu0
        %630 = vdwg.mxu0
        %631 = vst.msk [vmem:[%s281] sm:$0xff] %vm575, %v617
        %632 = vst.msk [vmem:[%s281 + $0x8] sm:$0xff] %vm575, %v620
        %633 = vst.msk [vmem:[%s281 + $0x10] sm:$0xff] %vm575, %v625
        %634 = vst.msk [vmem:[%s281 + $0x18] sm:$0xff] %vm575, %v628
        %s635 = sand.u32 %s161, 1
        %s636 = sand.u32 %s161, 1
        %s637 = smul.addr %s636, 32
        %s638 = scalar_lea.vmem [#allocation2], %s637
        // Predicated region
        $region45: #{tpu_custom_call.1} parent=43 // pred_check
          %p639 = pneg %p171
        $region46: #{tpu_custom_call.1} parent=43 // pred_check_branch
          %641 = sbr.rel (%p639) target = $region48
        $region47: #{tpu_custom_call.1} parent=43 // pred_region
          %s642 = smul.u32 4, %s17
          %s643 = ssub.s32 13, %s642
          %p644 = scmp.lt.s32.totalorder %s643, 4
          %s645 = scalar_select %p644, %s643, 4
          %s646 = smul.u32 128, %s645
          %p647 = scmp.ne.s32.totalorder 0, %s646
          %s648 = smul.addr %s642, 8
          %s649 = scalar_lea.vmem %s6, %s648
          // Predicated region
          $region49: #{tpu_custom_call.1} parent=47 // pred_check
            %p650 = pneg %p647
          $region50: #{tpu_custom_call.1} parent=47 // pred_check_branch
            %652 = sbr.rel (%p650) target = $region52
          $region51: #{tpu_custom_call.1} parent=47 // pred_region
            // Predicated region
            $region53: #{tpu_custom_call.1} parent=51 // pred_check
              _
            $region54: #{tpu_custom_call.1} parent=51 // pred_check_branch
              %654 = sbr.rel (0) target = $region56
            $region55: #{tpu_custom_call.1} parent=51 // pred_region
              // Predicated region
              $region75: #{tpu_custom_call.1} parent=55 // pred_check
                _
              $region76: #{tpu_custom_call.1} parent=55 // pred_check_branch
                %709 = sbr.rel (0) target = $region78
              $region77: #{tpu_custom_call.1} parent=55 // pred_region
                %s710 = sshrl.u32 %s645, 2
                // While loop
                $region79: #{tpu_custom_call.1} parent=77 // loop_pre_header
                  _
                $region80: #{tpu_custom_call.1} parent=77 // loop_header
                  %s712 = sphi 0, %s714
                  %p713 = scmp.ge.s32.totalorder %s712, %s710
                  %s717 = sphi 0, %s730
                  %s718 = sphi %s638, %s733
                  %s719 = sphi %s649, %s734
                $region81: #{tpu_custom_call.1} parent=77 // loop_header_branch
                  %716 = sbr.rel (%p713) target = $region85
                $region82: #{tpu_custom_call.1} parent=77 // loop_body
                  %v720 = vld [vmem:[%s718] sm:$0xff]
                  %721 = vst [vmem:[%s719] sm:$0xff] %v720
                  %v722 = vld [vmem:[%s718 + $0x8] sm:$0xff]
                  %723 = vst [vmem:[%s719 + $0x8] sm:$0xff] %v722
                  %v724 = vld [vmem:[%s718 + $0x10] sm:$0xff]
                  %725 = vst [vmem:[%s719 + $0x10] sm:$0xff] %v724
                  %v726 = vld [vmem:[%s718 + $0x18] sm:$0xff]
                  %727 = vst [vmem:[%s719 + $0x18] sm:$0xff] %v726
                  %s728 = sadd.s32 1, %s717
                  %p729 = scmp.ge.s32.totalorder %s728, %s710
                  %s730 = scalar_select %p729, 0, %s728
                  %s731 = smul.u32 %s730, 32
                  %s732 = smul.u32 %s730, 32
                  %s733 = scalar_lea.vmem %s638, %s731 [#allocation2]
                  %s734 = scalar_lea.vmem %s649, %s732
                $region83: #{tpu_custom_call.1} parent=77 // loop_footer
                  %s714 = sadd.s32 %s712, 1
                $region84: #{tpu_custom_call.1} parent=77 // loop_footer_branch
                  %711 = sbr.rel target = $region80
                $region85: #{tpu_custom_call.1} parent=77 // loop_exit
                  _
                %s735 = sshrl.u32 %s645, 2
                %s736 = sand.u32 %s645, 3
                %s737 = smul.u32 %s735, 4
                %s738 = smul.u32 8, %s737
                %s739 = scalar_lea.vmem %s638, %s738 [#allocation2]
                %s740 = smul.u32 8, %s737
                %s741 = scalar_lea.vmem %s649, %s740
                // While loop
                $region86: #{tpu_custom_call.1} parent=77 // loop_pre_header
                  _
                $region87: #{tpu_custom_call.1} parent=77 // loop_header
                  %s743 = sphi 0, %s745
                  %p744 = scmp.ge.s32.totalorder %s743, %s736
                  %s748 = sphi 0, %s755
                  %s749 = sphi %s739, %s758
                  %s750 = sphi %s741, %s759
                $region88: #{tpu_custom_call.1} parent=77 // loop_header_branch
                  %747 = sbr.rel (%p744) target = $region92
                $region89: #{tpu_custom_call.1} parent=77 // loop_body
                  %v751 = vld [vmem:[%s749] sm:$0xff]
                  %752 = vst [vmem:[%s750] sm:$0xff] %v751
                  %s753 = sadd.s32 1, %s748
                  %p754 = scmp.ge.s32.totalorder %s753, %s736
                  %s755 = scalar_select %p754, 0, %s753
                  %s756 = smul.u32 %s755, 8
                  %s757 = smul.u32 %s755, 8
                  %s758 = scalar_lea.vmem %s739, %s756 [#allocation2]
                  %s759 = scalar_lea.vmem %s741, %s757
                $region90: #{tpu_custom_call.1} parent=77 // loop_footer
                  %s745 = sadd.s32 %s743, 1
                $region91: #{tpu_custom_call.1} parent=77 // loop_footer_branch
                  %742 = sbr.rel target = $region87
                $region92: #{tpu_custom_call.1} parent=77 // loop_exit
                  _
              $region78: #{tpu_custom_call.1} parent=55 // pred_fallthru
                _
              // Predicated region
              $region93: #{tpu_custom_call.1} parent=55 // pred_check
                _
              $region94: #{tpu_custom_call.1} parent=55 // pred_check_branch
                %761 = sbr.rel target = $region96
              $region95: #{tpu_custom_call.1} parent=55 // pred_region
                _
              $region96: #{tpu_custom_call.1} parent=55 // pred_fallthru
                _
            $region56: #{tpu_custom_call.1} parent=51 // pred_fallthru
              _
            // Predicated region
            $region57: #{tpu_custom_call.1} parent=51 // pred_check
              _
            $region58: #{tpu_custom_call.1} parent=51 // pred_check_branch
              %656 = sbr.rel target = $region60
            $region59: #{tpu_custom_call.1} parent=51 // pred_region
              %s658 = sshrl.u32 %s645, 2
              // While loop
              $region61: #{tpu_custom_call.1} parent=59 // loop_pre_header
                _
              $region62: #{tpu_custom_call.1} parent=59 // loop_header
                %s660 = sphi 0, %s662
                %p661 = scmp.ge.s32.totalorder %s660, %s658
                %s665 = sphi 0, %s678
                %s666 = sphi %s638, %s681
                %s667 = sphi %s649, %s682
              $region63: #{tpu_custom_call.1} parent=59 // loop_header_branch
                %664 = sbr.rel (%p661) target = $region67
              $region64: #{tpu_custom_call.1} parent=59 // loop_body
                %v668 = vld [vmem:[%s666] sm:$0xff]
                %669 = vst [vmem:[%s667] sm:$0xff] %v668
                %v670 = vld [vmem:[%s666 + $0x8] sm:$0xff]
                %671 = vst [vmem:[%s667 + $0x8] sm:$0xff] %v670
                %v672 = vld [vmem:[%s666 + $0x10] sm:$0xff]
                %673 = vst [vmem:[%s667 + $0x10] sm:$0xff] %v672
                %v674 = vld [vmem:[%s666 + $0x18] sm:$0xff]
                %675 = vst [vmem:[%s667 + $0x18] sm:$0xff] %v674
                %s676 = sadd.s32 1, %s665
                %p677 = scmp.ge.s32.totalorder %s676, %s658
                %s678 = scalar_select %p677, 0, %s676
                %s679 = smul.u32 %s678, 32
                %s680 = smul.u32 %s678, 32
                %s681 = scalar_lea.vmem %s638, %s679 [#allocation2]
                %s682 = scalar_lea.vmem %s649, %s680
              $region65: #{tpu_custom_call.1} parent=59 // loop_footer
                %s662 = sadd.s32 %s660, 1
              $region66: #{tpu_custom_call.1} parent=59 // loop_footer_branch
                %659 = sbr.rel target = $region62
              $region67: #{tpu_custom_call.1} parent=59 // loop_exit
                _
              %s683 = sshrl.u32 %s645, 2
              %s684 = sand.u32 %s645, 3
              %s685 = smul.u32 %s683, 4
              %s686 = smul.u32 8, %s685
              %s687 = scalar_lea.vmem %s638, %s686 [#allocation2]
              %s688 = smul.u32 8, %s685
              %s689 = scalar_lea.vmem %s649, %s688
              // While loop
              $region68: #{tpu_custom_call.1} parent=59 // loop_pre_header
                _
              $region69: #{tpu_custom_call.1} parent=59 // loop_header
                %s691 = sphi 0, %s693
                %p692 = scmp.ge.s32.totalorder %s691, %s684
                %s696 = sphi 0, %s703
                %s697 = sphi %s687, %s706
                %s698 = sphi %s689, %s707
              $region70: #{tpu_custom_call.1} parent=59 // loop_header_branch
                %695 = sbr.rel (%p692) target = $region74
              $region71: #{tpu_custom_call.1} parent=59 // loop_body
                %v699 = vld [vmem:[%s697] sm:$0xff]
                %700 = vst [vmem:[%s698] sm:$0xff] %v699
                %s701 = sadd.s32 1, %s696
                %p702 = scmp.ge.s32.totalorder %s701, %s684
                %s703 = scalar_select %p702, 0, %s701
                %s704 = smul.u32 %s703, 8
                %s705 = smul.u32 %s703, 8
                %s706 = scalar_lea.vmem %s687, %s704 [#allocation2]
                %s707 = scalar_lea.vmem %s689, %s705
              $region72: #{tpu_custom_call.1} parent=59 // loop_footer
                %s693 = sadd.s32 %s691, 1
              $region73: #{tpu_custom_call.1} parent=59 // loop_footer_branch
                %690 = sbr.rel target = $region69
              $region74: #{tpu_custom_call.1} parent=59 // loop_exit
                _
            $region60: #{tpu_custom_call.1} parent=51 // pred_fallthru
              _
          $region52: #{tpu_custom_call.1} parent=47 // pred_fallthru
            _
          %762 = vnop
        $region48: #{tpu_custom_call.1} parent=43 // pred_fallthru
          _
      $region44: #{tpu_custom_call.1} parent=5 // pred_fallthru
        _
      %p763 = scmp.le.s32.totalorder 2, %s12
      // Predicated region
      $region97: #{tpu_custom_call.1} parent=5 // pred_check
        %p764 = pneg %p763
      $region98: #{tpu_custom_call.1} parent=5 // pred_check_branch
        %766 = sbr.rel (%p764) target = $region100
      $region99: #{tpu_custom_call.1} parent=5 // pred_region
        %s767 = ssub.s32 %s12, 2
        // Predicated region
        $region101: #{tpu_custom_call.1} parent=99 // pred_check
          %p768 = pneg %p177
        $region102: #{tpu_custom_call.1} parent=99 // pred_check_branch
          %770 = sbr.rel (%p768) target = $region104
        $region103: #{tpu_custom_call.1} parent=99 // pred_region
          %s771 = sand.u32 %s162, 1
          %s772 = sand.u32 %s162, 1
          %s773 = smul.addr %s772, 32
          %s774 = scalar_lea.vmem [#allocation2], %s773
        $region104: #{tpu_custom_call.1} parent=99 // pred_fallthru
          _
      $region100: #{tpu_custom_call.1} parent=5 // pred_fallthru
        _
    $region6: #{tpu_custom_call.1} parent=1 // loop_footer
      %s16 = sadd.s32 1, %s12
    $region7: #{tpu_custom_call.1} parent=1 // loop_footer_branch
      %11 = sbr.rel target = $region3
    $region8: #{tpu_custom_call.1} parent=1 // loop_exit
      _

// kernel: tpu_custom_call.1
$region0: #{tpu_custom_call.1}
  #allocation0 [shape = 'u32[]', space=smem, size = 0x4, offset = 0x4, fixed_abs, tag = 'smem constant byte address 0x4 - core index']
  #allocation1 [shape = 'u32[144,128]{1,0:T(1,128)}', space=vmem, size = 0x12000, scoped, tag = 'internal scratch']
  %s0 = inlined_call_operand.vmem [shape: s32[100,2], index: 0, kind: input, shape index: {}]
  %s1 = inlined_call_operand.vmem [shape: f32[100,16], index: 1, kind: input, shape index: {}]
  %s2 = inlined_call_operand.vmem [shape: f32[16,16], index: 2, kind: input, shape index: {}]
  %s3 = inlined_call_operand.vmem [shape: f32[2,32], index: 3, kind: input, shape index: {}]
  %s4 = inlined_call_operand.vmem [shape: bf16[16,32], index: 4, kind: input, shape index: {}]
  %s5 = inlined_call_operand.vmem [shape: bf16[32,32], index: 5, kind: input, shape index: {}]
  %s6 = inlined_call_operand.vmem [shape: f32[100,32], index: 6, kind: output, shape index: {}]
  %s7 = sld [smem:[#allocation0]]
  $region105: #{tpu_custom_call.1} parent=0
    _
  %s9 = ssub.s32 1, %s7
  %s10 = scalar_select 0, %s9, %s7
  $region1: #{tpu_custom_call.1} parent=0
    #allocation2 [shape = 'u8[32768]{0}', space=vmem, size = 0x8000, scoped, tag = 'output window, operand 0']
    loop: start=0, step=1, limit=6
    $region2: #{tpu_custom_call.1} parent=1 // loop_pre_header
      _
    $region3: #{tpu_custom_call.1} parent=1 // loop_header
      %s12 = sphi 0, %s16
      %p13 = scmp.ge.s32.totalorder %s12, 6
      %s22 = sphi 0, %s24
      %s25 = sphi 0, %s22
      %s26 = sphi 0, %s25
      %s42 = sphi 0, %s26
      %s48 = sphi 0, %s50
      %s51 = sphi 0, %s48
      %s52 = sphi 0, %s51
      %s68 = sphi 0, %s52
      %s72 = sphi 0, %s72
      %s74 = sphi 0, %s72
      %s75 = sphi 0, %s74
      %s89 = sphi 0, %s75
      %s93 = sphi 0, %s93
      %s95 = sphi 0, %s93
      %s96 = sphi 0, %s95
      %s110 = sphi 0, %s96
      %s114 = sphi 0, %s114
      %s116 = sphi 0, %s114
      %s117 = sphi 0, %s116
      %s131 = sphi 0, %s117
      %s135 = sphi 0, %s135
      %s137 = sphi 0, %s135
      %s138 = sphi 0, %s137
      %s152 = sphi 0, %s138
      %s158 = sphi 0, %s160
      %s161 = sphi 0, %s158
      %s162 = sphi 0, %s161
      %s178 = sphi 0, %s162
    $region4: #{tpu_custom_call.1} parent=1 // loop_header_branch
      %15 = sbr.rel (%p13) target = $region8
    $region5: #{tpu_custom_call.1} parent=1 // loop_body
      %s17 = ssub.s32 %s12, 1
      %s18 = ssub.s32 %s12, 2
      %s19 = sadd.s32 %s12, 1
      %s20 = ssub.s32 %s12, %s19
      %p21 = scmp.eq.s32.totalorder %s20, 0
      %s23 = sadd.s32 %s22, 1
      %s24 = scalar_select %p21, %s22, %s23
      %p27 = pneg %p21
      %p28 = scmp.eq.s32.totalorder %s12, 3
      %p29 = por %p27, %p28
      %p30 = scmp.ne.s32.totalorder %s22, %s25
      %p31 = scmp.eq.s32.totalorder %s12, 0
      %p32 = por %p30, %p31
      %p33 = scmp.ne.s32.totalorder %s22, %s25
      %p34 = scmp.eq.s32.totalorder %s17, 3
      %p35 = por %p33, %p34
      %p36 = scmp.ne.s32.totalorder %s25, %s26
      %p37 = scmp.eq.s32.totalorder %s17, 0
      %p38 = por %p36, %p37
      %p39 = scmp.ne.s32.totalorder %s25, %s26
      %p40 = scmp.eq.s32.totalorder %s18, 3
      %p41 = por %p39, %p40
      %p43 = scmp.ne.s32.totalorder %s26, %s42
      %p44 = scmp.eq.s32.totalorder %s18, 0
      %p45 = por %p43, %p44
      %s46 = ssub.s32 %s12, %s19
      %p47 = scmp.eq.s32.totalorder %s46, 0
      %s49 = sadd.s32 %s48, 1
      %s50 = scalar_select %p47, %s48, %s49
      %p53 = pneg %p47
      %p54 = scmp.eq.s32.totalorder %s12, 3
      %p55 = por %p53, %p54
      %p56 = scmp.ne.s32.totalorder %s48, %s51
      %p57 = scmp.eq.s32.totalorder %s12, 0
      %p58 = por %p56, %p57
      %p59 = scmp.ne.s32.totalorder %s48, %s51
      %p60 = scmp.eq.s32.totalorder %s17, 3
      %p61 = por %p59, %p60
      %p62 = scmp.ne.s32.totalorder %s51, %s52
      %p63 = scmp.eq.s32.totalorder %s17, 0
      %p64 = por %p62, %p63
      %p65 = scmp.ne.s32.totalorder %s51, %s52
      %p66 = scmp.eq.s32.totalorder %s18, 3
      %p67 = por %p65, %p66
      %p69 = scmp.ne.s32.totalorder %s52, %s68
      %p70 = scmp.eq.s32.totalorder %s18, 0
      %p71 = por %p69, %p70
      %s73 = sadd.s32 %s72, 1
      %p76 = scmp.eq.s32.totalorder %s12, 3
      %p77 = scmp.ne.s32.totalorder %s72, %s74
      %p78 = scmp.eq.s32.totalorder %s12, 0
      %p79 = por %p77, %p78
      %p80 = scmp.ne.s32.totalorder %s72, %s74
      %p81 = scmp.eq.s32.totalorder %s17, 3
      %p82 = por %p80, %p81
      %p83 = scmp.ne.s32.totalorder %s74, %s75
      %p84 = scmp.eq.s32.totalorder %s17, 0
      %p85 = por %p83, %p84
      %p86 = scmp.ne.s32.totalorder %s74, %s75
      %p87 = scmp.eq.s32.totalorder %s18, 3
      %p88 = por %p86, %p87
      %p90 = scmp.ne.s32.totalorder %s75, %s89
      %p91 = scmp.eq.s32.totalorder %s18, 0
      %p92 = por %p90, %p91
      %s94 = sadd.s32 %s93, 1
      %p97 = scmp.eq.s32.totalorder %s12, 3
      %p98 = scmp.ne.s32.totalorder %s93, %s95
      %p99 = scmp.eq.s32.totalorder %s12, 0
      %p100 = por %p98, %p99
      %p101 = scmp.ne.s32.totalorder %s93, %s95
      %p102 = scmp.eq.s32.totalorder %s17, 3
      %p103 = por %p101, %p102
      %p104 = scmp.ne.s32.totalorder %s95, %s96
      %p105 = scmp.eq.s32.totalorder %s17, 0
      %p106 = por %p104, %p105
      %p107 = scmp.ne.s32.totalorder %s95, %s96
      %p108 = scmp.eq.s32.totalorder %s18, 3
      %p109 = por %p107, %p108
      %p111 = scmp.ne.s32.totalorder %s96, %s110
      %p112 = scmp.eq.s32.totalorder %s18, 0
      %p113 = por %p111, %p112
      %s115 = sadd.s32 %s114, 1
      %p118 = scmp.eq.s32.totalorder %s12, 3
      %p119 = scmp.ne.s32.totalorder %s114, %s116
      %p120 = scmp.eq.s32.totalorder %s12, 0
      %p121 = por %p119, %p120
      %p122 = scmp.ne.s32.totalorder %s114, %s116
      %p123 = scmp.eq.s32.totalorder %s17, 3
      %p124 = por %p122, %p123
      %p125 = scmp.ne.s32.totalorder %s116, %s117
      %p126 = scmp.eq.s32.totalorder %s17, 0
      %p127 = por %p125, %p126
      %p128 = scmp.ne.s32.totalorder %s116, %s117
      %p129 = scmp.eq.s32.totalorder %s18, 3
      %p130 = por %p128, %p129
      %p132 = scmp.ne.s32.totalorder %s117, %s131
      %p133 = scmp.eq.s32.totalorder %s18, 0
      %p134 = por %p132, %p133
      %s136 = sadd.s32 %s135, 1
      %p139 = scmp.eq.s32.totalorder %s12, 3
      %p140 = scmp.ne.s32.totalorder %s135, %s137
      %p141 = scmp.eq.s32.totalorder %s12, 0
      %p142 = por %p140, %p141
      %p143 = scmp.ne.s32.totalorder %s135, %s137
      %p144 = scmp.eq.s32.totalorder %s17, 3
      %p145 = por %p143, %p144
      %p146 = scmp.ne.s32.totalorder %s137, %s138
      %p147 = scmp.eq.s32.totalorder %s17, 0
      %p148 = por %p146, %p147
      %p149 = scmp.ne.s32.totalorder %s137, %s138
      %p150 = scmp.eq.s32.totalorder %s18, 3
      %p151 = por %p149, %p150
      %p153 = scmp.ne.s32.totalorder %s138, %s152
      %p154 = scmp.eq.s32.totalorder %s18, 0
      %p155 = por %p153, %p154
      %s156 = ssub.s32 %s12, %s19
      %p157 = scmp.eq.s32.totalorder %s156, 0
      %s159 = sadd.s32 %s158, 1
      %s160 = scalar_select %p157, %s158, %s159
      %p163 = pneg %p157
      %p164 = scmp.eq.s32.totalorder %s12, 3
      %p165 = por %p163, %p164
      %p166 = scmp.ne.s32.totalorder %s158, %s161
      %p167 = scmp.eq.s32.totalorder %s12, 0
      %p168 = por %p166, %p167
      %p169 = scmp.ne.s32.totalorder %s158, %s161
      %p170 = scmp.eq.s32.totalorder %s17, 3
      %p171 = por %p169, %p170
      %p172 = scmp.ne.s32.totalorder %s161, %s162
      %p173 = scmp.eq.s32.totalorder %s17, 0
      %p174 = por %p172, %p173
      %p175 = scmp.ne.s32.totalorder %s161, %s162
      %p176 = scmp.eq.s32.totalorder %s18, 3
      %p177 = por %p175, %p176
      %p179 = scmp.ne.s32.totalorder %s162, %s178
      %p180 = scmp.eq.s32.totalorder %s18, 0
      %p181 = por %p179, %p180
      %p182 = scmp.le.s32.totalorder 1, %s12
      %p183 = scmp.lt.s32.totalorder %s12, 5
      %p184 = pnand %p182, %p183
      %p185 = pneg %p184
      // Predicated region
      $region9: #{tpu_custom_call.1} parent=5 // pred_check
        _
      $region10: #{tpu_custom_call.1} parent=5 // pred_check_branch
        %187 = sbr.rel (%p184) target = $region12
      $region11: #{tpu_custom_call.1} parent=5 // pred_region
        %s188 = ssub.s32 %s12, 1
        // Predicated region
        $region13: #{tpu_custom_call.1} parent=11 // pred_check
          %p189 = pneg %p85
        $region14: #{tpu_custom_call.1} parent=11 // pred_check_branch
          %191 = sbr.rel (%p189) target = $region16
        $region15: #{tpu_custom_call.1} parent=11 // pred_region
          _
        $region16: #{tpu_custom_call.1} parent=11 // pred_fallthru
          _
        // Predicated region
        $region17: #{tpu_custom_call.1} parent=11 // pred_check
          %p192 = pneg %p106
        $region18: #{tpu_custom_call.1} parent=11 // pred_check_branch
          %194 = sbr.rel (%p192) target = $region20
        $region19: #{tpu_custom_call.1} parent=11 // pred_region
          _
        $region20: #{tpu_custom_call.1} parent=11 // pred_fallthru
          _
        // Predicated region
        $region21: #{tpu_custom_call.1} parent=11 // pred_check
          %p195 = pneg %p127
        $region22: #{tpu_custom_call.1} parent=11 // pred_check_branch
          %197 = sbr.rel (%p195) target = $region24
        $region23: #{tpu_custom_call.1} parent=11 // pred_region
          _
        $region24: #{tpu_custom_call.1} parent=11 // pred_fallthru
          _
        // Predicated region
        $region25: #{tpu_custom_call.1} parent=11 // pred_check
          %p198 = pneg %p148
        $region26: #{tpu_custom_call.1} parent=11 // pred_check_branch
          %200 = sbr.rel (%p198) target = $region28
        $region27: #{tpu_custom_call.1} parent=11 // pred_region
          _
        $region28: #{tpu_custom_call.1} parent=11 // pred_fallthru
          _
      $region12: #{tpu_custom_call.1} parent=5 // pred_fallthru
        _
      %p201 = scmp.lt.s32.totalorder %s12, 4
      // Predicated region
      $region29: #{tpu_custom_call.1} parent=5 // pred_check
        %p202 = pneg %p201
      $region30: #{tpu_custom_call.1} parent=5 // pred_check_branch
        %204 = sbr.rel (%p202) target = $region32
      $region31: #{tpu_custom_call.1} parent=5 // pred_region
        // Predicated region
        $region33: #{tpu_custom_call.1} parent=31 // pred_check
          %p205 = pneg %p32
        $region34: #{tpu_custom_call.1} parent=31 // pred_check_branch
          %207 = sbr.rel (%p205) target = $region36
        $region35: #{tpu_custom_call.1} parent=31 // pred_region
          %s208 = smul.u32 4, %s12
          %s209 = ssub.s32 13, %s208
          %p210 = scmp.lt.s32.totalorder %s209, 4
          %s211 = scalar_select %p210, %s209, 4
          %s212 = smul.u32 128, %s211
          %p213 = scmp.lt.s32.totalorder %s208, 12
          %s214 = scalar_select %p213, %s208, 12
          %s215 = smul.addr %s214, 8
          %s216 = scalar_lea.vmem %s0, %s215
          %s217 = smul.u32 4, %s12
          %s218 = ssub.s32 13, %s217
          %p219 = scmp.lt.s32.totalorder %s218, 4
          %s220 = scalar_select %p219, %s218, 4
          %s221 = smul.u32 128, %s220
        $region36: #{tpu_custom_call.1} parent=31 // pred_fallthru
          _
        // Predicated region
        $region37: #{tpu_custom_call.1} parent=31 // pred_check
          %p222 = pneg %p58
        $region38: #{tpu_custom_call.1} parent=31 // pred_check_branch
          %224 = sbr.rel (%p222) target = $region40
        $region39: #{tpu_custom_call.1} parent=31 // pred_region
          %s225 = smul.u32 4, %s12
          %s226 = ssub.s32 13, %s225
          %p227 = scmp.lt.s32.totalorder %s226, 4
          %s228 = scalar_select %p227, %s226, 4
          %s229 = smul.u32 128, %s228
          %p230 = scmp.lt.s32.totalorder %s225, 12
          %s231 = scalar_select %p230, %s225, 12
          %s232 = smul.addr %s231, 8
          %s233 = scalar_lea.vmem %s1, %s232
          %s234 = smul.u32 4, %s12
          %s235 = ssub.s32 13, %s234
          %p236 = scmp.lt.s32.totalorder %s235, 4
          %s237 = scalar_select %p236, %s235, 4
          %s238 = smul.u32 128, %s237
        $region40: #{tpu_custom_call.1} parent=31 // pred_fallthru
          _
      $region32: #{tpu_custom_call.1} parent=5 // pred_fallthru
        _
      %p239 = scmp.le.s32.totalorder 1, %s12
      %p240 = scmp.lt.s32.totalorder %s12, 5
      %p241 = pnand %p239, %p240
      %p242 = pneg %p241
      // Predicated region
      $region41: #{tpu_custom_call.1} parent=5 // pred_check
        _
      $region42: #{tpu_custom_call.1} parent=5 // pred_check_branch
        %244 = sbr.rel (%p241) target = $region44
      $region43: #{tpu_custom_call.1} parent=5 // pred_region
        %s245 = ssub.s32 %s12, 1
        %s246 = smul.u32 4, %s17
        %s247 = ssub.s32 13, %s246
        %p248 = scmp.lt.s32.totalorder %s247, 4
        %s249 = scalar_select %p248, %s247, 4
        %s250 = smul.u32 128, %s249
        %p251 = scmp.lt.s32.totalorder %s246, 12
        %s252 = scalar_select %p251, %s246, 12
        %s253 = smul.addr %s252, 8
        %s254 = scalar_lea.vmem %s0, %s253
        %p255 = pneg %p38
        %p256 = pneg %p35
        %s257 = smul.u32 4, %s17
        %s258 = ssub.s32 13, %s257
        %p259 = scmp.lt.s32.totalorder %s258, 4
        %s260 = scalar_select %p259, %s258, 4
        %s261 = smul.u32 128, %s260
        %p262 = scmp.lt.s32.totalorder %s257, 12
        %s263 = scalar_select %p262, %s257, 12
        %s264 = smul.addr %s263, 8
        %s265 = scalar_lea.vmem %s1, %s264
        %p266 = pneg %p64
        %p267 = pneg %p61
        %p268 = pneg %p85
        %p269 = pneg %p82
        %p270 = pneg %p106
        %p271 = pneg %p103
        %p272 = pneg %p127
        %p273 = pneg %p124
        %p274 = pneg %p148
        %p275 = pneg %p145
        %p276 = pneg %p174
        %p277 = pneg %p171
        %s278 = sand.u32 %s161, 1
        %s279 = sand.u32 %s161, 1
        %s280 = smul.addr %s279, 32
        %s281 = scalar_lea.vmem [#allocation2], %s280
        %s282 = smul.u32 4, %s17
        %s283 = ssub.s32 13, %s282
        %p284 = scmp.lt.s32.totalorder %s283, 4
        %s285 = scalar_select %p284, %s283, 4
        %s286 = smul.u32 128, %s285
        %p287 = scmp.lt.s32.totalorder %s282, 12
        %s288 = scalar_select %p287, %s282, 12
        %s289 = smul.addr %s288, 8
        %s290 = scalar_lea.vmem %s0, %s289
        %s291 = smul.u32 4, %s17
        %s292 = ssub.s32 13, %s291
        %p293 = scmp.lt.s32.totalorder %s292, 4
        %s294 = scalar_select %p293, %s292, 4
        %s295 = smul.u32 128, %s294
        %s296 = smul.u32 4, %s17
        %s297 = ssub.s32 13, %s296
        %p298 = scmp.lt.s32.totalorder %s297, 4
        %s299 = scalar_select %p298, %s297, 4
        %s300 = smul.u32 128, %s299
        %p301 = scmp.lt.s32.totalorder %s296, 12
        %s302 = scalar_select %p301, %s296, 12
        %s303 = smul.addr %s302, 8
        %s304 = scalar_lea.vmem %s1, %s303
        %s305 = smul.u32 4, %s17
        %s306 = ssub.s32 13, %s305
        %p307 = scmp.lt.s32.totalorder %s306, 4
        %s308 = scalar_select %p307, %s306, 4
        %s309 = smul.u32 128, %s308
        %s310 = smul.u32 4, %s17
        %s311 = ssub.s32 13, %s310
        %p312 = scmp.lt.s32.totalorder %s311, 4
        %s313 = scalar_select %p312, %s311, 4
        %s314 = smul.u32 128, %s313
        %v316 = vld [vmem:[%s290] sm:$0xff]
        %v317 = vld [vmem:[%s290 + $0x8] sm:$0xff]
        %v318 = vld [vmem:[%s290 + $0x10] sm:$0xff]
        %v319 = vld [vmem:[%s290 + $0x18] sm:$0xff]
        %v320 = vld [vmem:[%s2] sm:$0xff]
        %v321 = vld [vmem:[%s2 + $0x8] sm:$0xff]
        %v322 = vlaneseq
        %v323 = vand.u32 %v322, 127
        %324 = vset.pattern.permute.xlu0 0
        %325 = vperm.xlu0 %324, %v316
        %v326 = vpop.permute.xlu0 %325
        %327 = vset.pattern.permute.xlu0 0
        %328 = vperm.xlu0 %327, %v317
        %v329 = vpop.permute.xlu0 %328
        %330 = vset.pattern.permute.xlu0 0
        %331 = vperm.xlu0 %330, %v318
        %v332 = vpop.permute.xlu0 %331
        %333 = vset.pattern.permute.xlu0 0
        %334 = vperm.xlu0 %333, %v319
        %v335 = vpop.permute.xlu0 %334
        %vm336 = vcmp.eq.s32.totalorder %v323, %v326
        %vm337 = vcmp.eq.s32.totalorder %v323, %v329
        %vm338 = vcmp.eq.s32.totalorder %v323, %v332
        %vm339 = vcmp.eq.s32.totalorder %v323, %v335
        %v340 = vsel %vm336, 1, 0
        %v341 = vsel %vm337, 1, 0
        %v342 = vsel %vm338, 1, 0
        %v343 = vsel %vm339, 1, 0
        %v344 = vcvt.s32.f32 %v340
        %v345 = vcvt.s32.f32 %v341
        %v346 = vcvt.s32.f32 %v342
        %v347 = vcvt.s32.f32 %v343
        %348 = vset.pattern.permute.xlu0 1
        %349 = vperm.xlu0 %348, %v316
        %v350 = vpop.permute.xlu0 %349
        %351 = vset.pattern.permute.xlu0 1
        %352 = vperm.xlu0 %351, %v317
        %v353 = vpop.permute.xlu0 %352
        %354 = vset.pattern.permute.xlu0 1
        %355 = vperm.xlu0 %354, %v318
        %v356 = vpop.permute.xlu0 %355
        %357 = vset.pattern.permute.xlu0 1
        %358 = vperm.xlu0 %357, %v319
        %v359 = vpop.permute.xlu0 %358
        %vm360 = vcmp.eq.s32.totalorder %v323, %v350
        %vm361 = vcmp.eq.s32.totalorder %v323, %v353
        %vm362 = vcmp.eq.s32.totalorder %v323, %v356
        %vm363 = vcmp.eq.s32.totalorder %v323, %v359
        %v364 = vsel %vm360, 1, 0
        %v365 = vsel %vm361, 1, 0
        %v366 = vsel %vm362, 1, 0
        %v367 = vsel %vm363, 1, 0
        %v368 = vcvt.s32.f32 %v364
        %v369 = vcvt.s32.f32 %v365
        %v370 = vcvt.s32.f32 %v366
        %v371 = vcvt.s32.f32 %v367
        %v372 = vadd.f32 %v344, %v368
        %v373 = vadd.f32 %v345, %v369
        %v374 = vadd.f32 %v346, %v370
        %v375 = vadd.f32 %v347, %v371
        %v376 = vld [vmem:[%s304] sm:$0xff]
        %v377 = vld [vmem:[%s304 + $0x8] sm:$0xff]
        %v378 = vld [vmem:[%s304 + $0x10] sm:$0xff]
        %v379 = vld [vmem:[%s304 + $0x18] sm:$0xff]
        %vm380 = vcmask 130048
        %v382 = vsel %vm380, %v372, 0
        %v385 = vsel %vm380, %v373, 0
        %v388 = vsel %vm380, %v374, 0
        %v391 = vsel %vm380, %v375, 0
        %393 = vmatprep.subr.mxu0 0.0
        %394 = vmatpush1.msra.mxu0 %v320
        %395 = vmatprep.subr.mxu0 0.0
        %396 = vmatpush1.msra.mxu0 %v321
        %397 = vmatprep.subr.mxu0 0.0
        %398 = vmatpush1.msra.mxu0 0.0
        %399 = vmatprep.subr.mxu0 0.0
        %400 = vmatpush1.msra.mxu0 0.0
        %401 = vmatprep.subr.mxu0 0.0
        %402 = vmatpush1.msra.mxu0 0.0
        %403 = vmatprep.subr.mxu0 0.0
        %404 = vmatpush1.msra.mxu0 0.0
        %405 = vmatprep.subr.mxu0 0.0
        %406 = vmatpush1.msra.mxu0 0.0
        %407 = vmatprep.subr.mxu0 0.0
        %408 = vmatpush1.msra.mxu0 0.0
        %409 = vmatprep.subr.mxu0 0.0
        %410 = vmatpush1.msra.mxu0 0.0
        %411 = vmatprep.subr.mxu0 0.0
        %412 = vmatpush1.msra.mxu0 0.0
        %413 = vmatprep.subr.mxu0 0.0
        %414 = vmatpush1.msra.mxu0 0.0
        %415 = vmatprep.subr.mxu0 0.0
        %416 = vmatpush1.msra.mxu0 0.0
        %417 = vmatprep.subr.mxu0 0.0
        %418 = vmatpush1.msra.mxu0 0.0
        %419 = vmatprep.subr.mxu0 0.0
        %420 = vmatpush1.msra.mxu0 0.0
        %421 = vmatprep.subr.mxu0 0.0
        %422 = vmatpush1.msra.mxu0 0.0
        %423 = vmatprep.subr.mxu0 0.0
        %424 = vmatpush1.msra.mxu0 0.0
        %425 = vmatprep.subr.mxu0 0.0
        %426 = vmatpush1.msra.mxu0 0.0
        %427 = vmatprep.subr.mxu0 0.0
        %428 = vmatpush1.msra.mxu0 0.0
        %429 = vmatprep.subr.mxu0 0.0
        %430 = vmatpush1.msra.mxu0 0.0
        %431 = vmatprep.subr.mxu0 0.0
        %432 = vmatpush1.msra.mxu0 0.0
        %433 = vmatprep.subr.mxu0 0.0
        %434 = vmatpush1.msra.mxu0 0.0
        %435 = vmatprep.subr.mxu0 0.0
        %436 = vmatpush1.msra.mxu0 0.0
        %437 = vmatprep.subr.mxu0 0.0
        %438 = vmatpush1.msra.mxu0 0.0
        %439 = vmatprep.subr.mxu0 0.0
        %440 = vmatpush1.msra.mxu0 0.0
        %441 = vmatprep.subr.mxu0 0.0
        %442 = vmatpush1.msra.mxu0 0.0
        %443 = vmatprep.subr.mxu0 0.0
        %444 = vmatpush1.msra.mxu0 0.0
        %445 = vmatprep.subr.mxu0 0.0
        %446 = vmatpush1.msra.mxu0 0.0
        %447 = vmatprep.subr.mxu0 0.0
        %448 = vmatpush1.msra.mxu0 0.0
        %449 = vmatprep.subr.mxu0 0.0
        %450 = vmatpush1.msra.mxu0 0.0
        %451 = vmatprep.subr.mxu0 0.0
        %452 = vmatpush1.msra.mxu0 0.0
        %453 = vmatprep.subr.mxu0 0.0
        %454 = vmatpush1.msra.mxu0 0.0
        %455 = vmatprep.subr.mxu0 0.0
        %456 = vmatpush1.msra.mxu0 0.0
        %457 = vmatprep.mubr.f32.mxu0 0.0
        %458 = vmatmul.mubr.f32.gmra.mrb[0].mxu0 %v382
        %v459 = vpop.f32.mrb[0].mxu0
        %v460 = vadd.f32 %v376, %v459
        %v461 = vpop.f32.mrb[0].mxu0
        %462 = vmatprep.mubr.f32.mxu0 0.0
        %463 = vmatmul.mubr.f32.gmra.mrb[0].mxu0 %v385
        %v464 = vpop.f32.mrb[0].mxu0
        %v465 = vadd.f32 %v377, %v464
        %v466 = vpop.f32.mrb[0].mxu0
        %467 = vmatprep.mubr.f32.mxu0 0.0
        %468 = vmatmul.mubr.f32.gmra.mrb[0].mxu0 %v388
        %v469 = vpop.f32.mrb[0].mxu0
        %v470 = vadd.f32 %v378, %v469
        %v471 = vpop.f32.mrb[0].mxu0
        %472 = vmatprep.mubr.f32.mxu0 0.0
        %473 = vmatmul.mubr.f32.gmra.mrb[0].mxu0 %v391
        %v474 = vpop.f32.mrb[0].mxu0
        %v475 = vadd.f32 %v379, %v474
        %v476 = vpop.f32.mrb[0].mxu0
        %477 = vdwg.mxu0
        %v478 = vld [vmem:[%s4] sm:$0xf]
        %v479 = vld [vmem:[%s4 + $0x4] sm:$0xf]
        %v480 = vld [vmem:[%s3] sm:$0x1]
        %v481 = vpack.c.bf16 %v465, %v460
        %v482 = vpack.c.bf16 %v475, %v470
        %v483 = vlaneseq
        %v484 = vshrl.u32 %v483, 7
        %v485 = vsub.s32 0, %v484
        %v486 = vrot.slane %v480, %v485
        %v489 = vunpack.c.l.b16 %v478
        %v490 = vunpack.c.l.b16 %v479
        %v491 = vpack.c.b16 %v490, %v489
        %v494 = vsel %vm380, %v481, 0
        %v497 = vsel %vm380, %v482, 0
        %499 = vmatprep.subr.bf16.mxu0 0
        %500 = vmatpush1.bf16.msra.mxu0 %v491
        %501 = vmatprep.subr.bf16.mxu0 0
        %502 = vmatpush1.bf16.msra.mxu0 0
        %503 = vmatprep.subr.bf16.mxu0 0
        %504 = vmatpush1.bf16.msra.mxu0 0
        %505 = vmatprep.subr.bf16.mxu0 0
        %506 = vmatpush1.bf16.msra.mxu0 0
        %507 = vmatprep.subr.bf16.mxu0 0
        %508 = vmatpush1.bf16.msra.mxu0 0
        %509 = vmatprep.subr.bf16.mxu0 0
        %510 = vmatpush1.bf16.msra.mxu0 0
        %511 = vmatprep.subr.bf16.mxu0 0
        %512 = vmatpush1.bf16.msra.mxu0 0
        %513 = vmatprep.subr.bf16.mxu0 0
        %514 = vmatpush1.bf16.msra.mxu0 0
        %515 = vmatprep.subr.bf16.mxu0 0
        %516 = vmatpush1.bf16.msra.mxu0 0
        %517 = vmatprep.subr.bf16.mxu0 0
        %518 = vmatpush1.bf16.msra.mxu0 0
        %519 = vmatprep.subr.bf16.mxu0 0
        %520 = vmatpush1.bf16.msra.mxu0 0
        %521 = vmatprep.subr.bf16.mxu0 0
        %522 = vmatpush1.bf16.msra.mxu0 0
        %523 = vmatprep.subr.bf16.mxu0 0
        %524 = vmatpush1.bf16.msra.mxu0 0
        %525 = vmatprep.subr.bf16.mxu0 0
        %526 = vmatpush1.bf16.msra.mxu0 0
        %527 = vmatprep.subr.bf16.mxu0 0
        %528 = vmatpush1.bf16.msra.mxu0 0
        %529 = vmatprep.subr.bf16.mxu0 0
        %530 = vmatpush1.bf16.msra.mxu0 0
        %531 = vmatprep.mubr.bf16.mxu0 0
        %532 = vmatmul.mubr.bf16.gmra.mrb[0].mxu0 %v494
        %v533 = vpop.f32.mrb[0].mxu0
        %v534 = vadd.f32 %v486, %v533
        %v535 = vpop.f32.mrb[0].mxu0
        %v536 = vpop.f32.mrb[0].mxu0
        %v537 = vadd.f32 %v486, %v536
        %v538 = vpop.f32.mrb[0].mxu0
        %539 = vmatprep.mubr.bf16.mxu0 0
        %540 = vmatmul.mubr.bf16.gmra.mrb[0].mxu0 %v497
        %v541 = vpop.f32.mrb[0].mxu0
        %v542 = vadd.f32 %v486, %v541
        %v543 = vpop.f32.mrb[0].mxu0
        %v544 = vpop.f32.mrb[0].mxu0
        %v545 = vadd.f32 %v486, %v544
        %v546 = vpop.f32.mrb[0].mxu0
        %547 = vdwg.mxu0
        %v548 = vtanh.pop %v534
        %v549 = vtanh.pop %v537
        %v550 = vtanh.pop %v542
        %v551 = vtanh.pop %v545
        %v552 = vld [vmem:[%s5] sm:$0xf]
        %v553 = vld [vmem:[%s5 + $0x4] sm:$0xf]
        %v554 = vld [vmem:[%s5 + $0x8] sm:$0xf]
        %v555 = vld [vmem:[%s5 + $0xc] sm:$0xf]
        %v556 = vld [vmem:[%s3 + $0x1] sm:$0x1]
        %v557 = vpack.c.bf16 %v549, %v548
        %v558 = vpack.c.bf16 %v551, %v550
        %v559 = vlaneseq
        %v560 = vshrl.u32 %v559, 7
        %v561 = vsub.s32 0, %v560
        %v562 = vrot.slane %v556, %v561
        %v567 = vunpack.c.l.b16 %v552
        %v568 = vunpack.c.l.b16 %v553
        %v569 = vunpack.c.l.b16 %v554
        %v570 = vunpack.c.l.b16 %v555
        %v571 = vpack.c.b16 %v568, %v567
        %v572 = vpack.c.b16 %v570, %v569
        %vm575 = vcmask 261120
        %v577 = vsel %vm575, %v557, 0
        %v580 = vsel %vm575, %v558, 0
        %582 = vmatprep.subr.bf16.mxu0 0
        %583 = vmatpush1.bf16.msra.mxu0 %v571
        %584 = vmatprep.subr.bf16.mxu0 0
        %585 = vmatpush1.bf16.msra.mxu0 %v572
        %586 = vmatprep.subr.bf16.mxu0 0
        %587 = vmatpush1.bf16.msra.mxu0 0
        %588 = vmatprep.subr.bf16.mxu0 0
        %589 = vmatpush1.bf16.msra.mxu0 0
        %590 = vmatprep.subr.bf16.mxu0 0
        %591 = vmatpush1.bf16.msra.mxu0 0
        %592 = vmatprep.subr.bf16.mxu0 0
        %593 = vmatpush1.bf16.msra.mxu0 0
        %594 = vmatprep.subr.bf16.mxu0 0
        %595 = vmatpush1.bf16.msra.mxu0 0
        %596 = vmatprep.subr.bf16.mxu0 0
        %597 = vmatpush1.bf16.msra.mxu0 0
        %598 = vmatprep.subr.bf16.mxu0 0
        %599 = vmatpush1.bf16.msra.mxu0 0
        %600 = vmatprep.subr.bf16.mxu0 0
        %601 = vmatpush1.bf16.msra.mxu0 0
        %602 = vmatprep.subr.bf16.mxu0 0
        %603 = vmatpush1.bf16.msra.mxu0 0
        %604 = vmatprep.subr.bf16.mxu0 0
        %605 = vmatpush1.bf16.msra.mxu0 0
        %606 = vmatprep.subr.bf16.mxu0 0
        %607 = vmatpush1.bf16.msra.mxu0 0
        %608 = vmatprep.subr.bf16.mxu0 0
        %609 = vmatpush1.bf16.msra.mxu0 0
        %610 = vmatprep.subr.bf16.mxu0 0
        %611 = vmatpush1.bf16.msra.mxu0 0
        %612 = vmatprep.subr.bf16.mxu0 0
        %613 = vmatpush1.bf16.msra.mxu0 0
        %614 = vmatprep.mubr.bf16.mxu0 0
        %615 = vmatmul.mubr.bf16.gmra.mrb[0].mxu0 %v577
        %v616 = vpop.f32.mrb[0].mxu0
        %v617 = vadd.f32 %v562, %v616
        %v618 = vpop.f32.mrb[0].mxu0
        %v619 = vpop.f32.mrb[0].mxu0
        %v620 = vadd.f32 %v562, %v619
        %v621 = vpop.f32.mrb[0].mxu0
        %622 = vmatprep.mubr.bf16.mxu0 0
        %623 = vmatmul.mubr.bf16.gmra.mrb[0].mxu0 %v580
        %v624 = vpop.f32.mrb[0].mxu0
        %v625 = vadd.f32 %v562, %v624
        %v626 = vpop.f32.mrb[0].mxu0
        %v627 = vpop.f32.mrb[0].mxu0
        %v628 = vadd.f32 %v562, %v627
        %v629 = vpop.f32.mrb[0].mxu0
        %630 = vdwg.mxu0
        %631 = vst.msk [vmem:[%s281] sm:$0xff] %vm575, %v617
        %632 = vst.msk [vmem:[%s281 + $0x8] sm:$0xff] %vm575, %v620
        %633 = vst.msk [vmem:[%s281 + $0x10] sm:$0xff] %vm575, %v625
        %634 = vst.msk [vmem:[%s281 + $0x18] sm:$0xff] %vm575, %v628
        %s635 = sand.u32 %s161, 1
        %s636 = sand.u32 %s161, 1
        %s637 = smul.addr %s636, 32
        %s638 = scalar_lea.vmem [#allocation2], %s637
        // Predicated region
        $region45: #{tpu_custom_call.1} parent=43 // pred_check
          %p639 = pneg %p171
        $region46: #{tpu_custom_call.1} parent=43 // pred_check_branch
          %641 = sbr.rel (%p639) target = $region48
        $region47: #{tpu_custom_call.1} parent=43 // pred_region
          %s642 = smul.u32 4, %s17
          %s643 = ssub.s32 13, %s642
          %p644 = scmp.lt.s32.totalorder %s643, 4
          %s645 = scalar_select %p644, %s643, 4
          %s646 = smul.u32 128, %s645
          %p647 = scmp.ne.s32.totalorder 0, %s646
          %s648 = smul.addr %s642, 8
          %s649 = scalar_lea.vmem %s6, %s648
          // Predicated region
          $region49: #{tpu_custom_call.1} parent=47 // pred_check
            %p650 = pneg %p647
          $region50: #{tpu_custom_call.1} parent=47 // pred_check_branch
            %652 = sbr.rel (%p650) target = $region52
          $region51: #{tpu_custom_call.1} parent=47 // pred_region
            // Predicated region
            $region53: #{tpu_custom_call.1} parent=51 // pred_check
              _
            $region54: #{tpu_custom_call.1} parent=51 // pred_check_branch
              %654 = sbr.rel (0) target = $region56
            $region55: #{tpu_custom_call.1} parent=51 // pred_region
              // Predicated region
              $region75: #{tpu_custom_call.1} parent=55 // pred_check
                _
              $region76: #{tpu_custom_call.1} parent=55 // pred_check_branch
                %709 = sbr.rel (0) target = $region78
              $region77: #{tpu_custom_call.1} parent=55 // pred_region
                %s710 = sshrl.u32 %s645, 2
                // While loop
                $region79: #{tpu_custom_call.1} parent=77 // loop_pre_header
                  _
                $region80: #{tpu_custom_call.1} parent=77 // loop_header
                  %s712 = sphi 0, %s714
                  %p713 = scmp.ge.s32.totalorder %s712, %s710
                  %s717 = sphi 0, %s730
                  %s718 = sphi %s638, %s733
                  %s719 = sphi %s649, %s734
                $region81: #{tpu_custom_call.1} parent=77 // loop_header_branch
                  %716 = sbr.rel (%p713) target = $region85
                $region82: #{tpu_custom_call.1} parent=77 // loop_body
                  %v720 = vld [vmem:[%s718] sm:$0xff]
                  %721 = vst [vmem:[%s719] sm:$0xff] %v720
                  %v722 = vld [vmem:[%s718 + $0x8] sm:$0xff]
                  %723 = vst [vmem:[%s719 + $0x8] sm:$0xff] %v722
                  %v724 = vld [vmem:[%s718 + $0x10] sm:$0xff]
                  %725 = vst [vmem:[%s719 + $0x10] sm:$0xff] %v724
                  %v726 = vld [vmem:[%s718 + $0x18] sm:$0xff]
                  %727 = vst [vmem:[%s719 + $0x18] sm:$0xff] %v726
                  %s728 = sadd.s32 1, %s717
                  %p729 = scmp.ge.s32.totalorder %s728, %s710
                  %s730 = scalar_select %p729, 0, %s728
                  %s731 = smul.u32 %s730, 32
                  %s732 = smul.u32 %s730, 32
                  %s733 = scalar_lea.vmem %s638, %s731 [#allocation2]
                  %s734 = scalar_lea.vmem %s649, %s732
                $region83: #{tpu_custom_call.1} parent=77 // loop_footer
                  %s714 = sadd.s32 %s712, 1
                $region84: #{tpu_custom_call.1} parent=77 // loop_footer_branch
                  %711 = sbr.rel target = $region80
                $region85: #{tpu_custom_call.1} parent=77 // loop_exit
                  _
                %s735 = sshrl.u32 %s645, 2
                %s736 = sand.u32 %s645, 3
                %s737 = smul.u32 %s735, 4
                %s738 = smul.u32 8, %s737
                %s739 = scalar_lea.vmem %s638, %s738 [#allocation2]
                %s740 = smul.u32 8, %s737
                %s741 = scalar_lea.vmem %s649, %s740
                // While loop
                $region86: #{tpu_custom_call.1} parent=77 // loop_pre_header
                  _
                $region87: #{tpu_custom_call.1} parent=77 // loop_header
                  %s743 = sphi 0, %s745
                  %p744 = scmp.ge.s32.totalorder %s743, %s736
                  %s748 = sphi 0, %s755
                  %s749 = sphi %s739, %s758
                  %s750 = sphi %s741, %s759
                $region88: #{tpu_custom_call.1} parent=77 // loop_header_branch
                  %747 = sbr.rel (%p744) target = $region92
                $region89: #{tpu_custom_call.1} parent=77 // loop_body
                  %v751 = vld [vmem:[%s749] sm:$0xff]
                  %752 = vst [vmem:[%s750] sm:$0xff] %v751
                  %s753 = sadd.s32 1, %s748
                  %p754 = scmp.ge.s32.totalorder %s753, %s736
                  %s755 = scalar_select %p754, 0, %s753
                  %s756 = smul.u32 %s755, 8
                  %s757 = smul.u32 %s755, 8
                  %s758 = scalar_lea.vmem %s739, %s756 [#allocation2]
                  %s759 = scalar_lea.vmem %s741, %s757
                $region90: #{tpu_custom_call.1} parent=77 // loop_footer
                  %s745 = sadd.s32 %s743, 1
                $region91: #{tpu_custom_call.1} parent=77 // loop_footer_branch
                  %742 = sbr.rel target = $region87
                $region92: #{tpu_custom_call.1} parent=77 // loop_exit
                  _
              $region78: #{tpu_custom_call.1} parent=55 // pred_fallthru
                _
              // Predicated region
              $region93: #{tpu_custom_call.1} parent=55 // pred_check
                _
              $region94: #{tpu_custom_call.1} parent=55 // pred_check_branch
                %761 = sbr.rel target = $region96
              $region95: #{tpu_custom_call.1} parent=55 // pred_region
                _
              $region96: #{tpu_custom_call.1} parent=55 // pred_fallthru
                _
            $region56: #{tpu_custom_call.1} parent=51 // pred_fallthru
              _
            // Predicated region
            $region57: #{tpu_custom_call.1} parent=51 // pred_check
              _
            $region58: #{tpu_custom_call.1} parent=51 // pred_check_branch
              %656 = sbr.rel target = $region60
            $region59: #{tpu_custom_call.1} parent=51 // pred_region
              %s658 = sshrl.u32 %s645, 2
              // While loop
              $region61: #{tpu_custom_call.1} parent=59 // loop_pre_header
                _
              $region62: #{tpu_custom_call.1} parent=59 // loop_header
                %s660 = sphi 0, %s662
                %p661 = scmp.ge.s32.totalorder %s660, %s658
                %s665 = sphi 0, %s678
                %s666 = sphi %s638, %s681
                %s667 = sphi %s649, %s682
              $region63: #{tpu_custom_call.1} parent=59 // loop_header_branch
                %664 = sbr.rel (%p661) target = $region67
              $region64: #{tpu_custom_call.1} parent=59 // loop_body
                %v668 = vld [vmem:[%s666] sm:$0xff]
                %669 = vst [vmem:[%s667] sm:$0xff] %v668
                %v670 = vld [vmem:[%s666 + $0x8] sm:$0xff]
                %671 = vst [vmem:[%s667 + $0x8] sm:$0xff] %v670
                %v672 = vld [vmem:[%s666 + $0x10] sm:$0xff]
                %673 = vst [vmem:[%s667 + $0x10] sm:$0xff] %v672
                %v674 = vld [vmem:[%s666 + $0x18] sm:$0xff]
                %675 = vst [vmem:[%s667 + $0x18] sm:$0xff] %v674
                %s676 = sadd.s32 1, %s665
                %p677 = scmp.ge.s32.totalorder %s676, %s658
                %s678 = scalar_select %p677, 0, %s676
                %s679 = smul.u32 %s678, 32
                %s680 = smul.u32 %s678, 32
                %s681 = scalar_lea.vmem %s638, %s679 [#allocation2]
                %s682 = scalar_lea.vmem %s649, %s680
              $region65: #{tpu_custom_call.1} parent=59 // loop_footer
                %s662 = sadd.s32 %s660, 1
              $region66: #{tpu_custom_call.1} parent=59 // loop_footer_branch
                %659 = sbr.rel target = $region62
              $region67: #{tpu_custom_call.1} parent=59 // loop_exit
                _
              %s683 = sshrl.u32 %s645, 2
              %s684 = sand.u32 %s645, 3
              %s685 = smul.u32 %s683, 4
              %s686 = smul.u32 8, %s685
              %s687 = scalar_lea.vmem %s638, %s686 [#allocation2]
              %s688 = smul.u32 8, %s685
              %s689 = scalar_lea.vmem %s649, %s688
              // While loop
              $region68: #{tpu_custom_call.1} parent=59 // loop_pre_header
                _
              $region69: #{tpu_custom_call.1} parent=59 // loop_header
                %s691 = sphi 0, %s693
                %p692 = scmp.ge.s32.totalorder %s691, %s684
                %s696 = sphi 0, %s703
                %s697 = sphi %s687, %s706
                %s698 = sphi %s689, %s707
              $region70: #{tpu_custom_call.1} parent=59 // loop_header_branch
                %695 = sbr.rel (%p692) target = $region74
              $region71: #{tpu_custom_call.1} parent=59 // loop_body
                %v699 = vld [vmem:[%s697] sm:$0xff]
                %700 = vst [vmem:[%s698] sm:$0xff] %v699
                %s701 = sadd.s32 1, %s696
                %p702 = scmp.ge.s32.totalorder %s701, %s684
                %s703 = scalar_select %p702, 0, %s701
                %s704 = smul.u32 %s703, 8
                %s705 = smul.u32 %s703, 8
                %s706 = scalar_lea.vmem %s687, %s704 [#allocation2]
                %s707 = scalar_lea.vmem %s689, %s705
              $region72: #{tpu_custom_call.1} parent=59 // loop_footer
                %s693 = sadd.s32 %s691, 1
              $region73: #{tpu_custom_call.1} parent=59 // loop_footer_branch
                %690 = sbr.rel target = $region69
              $region74: #{tpu_custom_call.1} parent=59 // loop_exit
                _
            $region60: #{tpu_custom_call.1} parent=51 // pred_fallthru
              _
          $region52: #{tpu_custom_call.1} parent=47 // pred_fallthru
            _
          %762 = vnop
        $region48: #{tpu_custom_call.1} parent=43 // pred_fallthru
          _
      $region44: #{tpu_custom_call.1} parent=5 // pred_fallthru
        _
      %p763 = scmp.le.s32.totalorder 2, %s12
      // Predicated region
      $region97: #{tpu_custom_call.1} parent=5 // pred_check
        %p764 = pneg %p763
      $region98: #{tpu_custom_call.1} parent=5 // pred_check_branch
        %766 = sbr.rel (%p764) target = $region100
      $region99: #{tpu_custom_call.1} parent=5 // pred_region
        %s767 = ssub.s32 %s12, 2
        // Predicated region
        $region101: #{tpu_custom_call.1} parent=99 // pred_check
          %p768 = pneg %p177
        $region102: #{tpu_custom_call.1} parent=99 // pred_check_branch
          %770 = sbr.rel (%p768) target = $region104
        $region103: #{tpu_custom_call.1} parent=99 // pred_region
          %s771 = sand.u32 %s162, 1
          %s772 = sand.u32 %s162, 1
          %s773 = smul.addr %s772, 32
          %s774 = scalar_lea.vmem [#allocation2], %s773
        $region104: #{tpu_custom_call.1} parent=99 // pred_fallthru
          _
      $region100: #{tpu_custom_call.1} parent=5 // pred_fallthru
        _
    $region6: #{tpu_custom_call.1} parent=1 // loop_footer
      %s16 = sadd.s32 1, %s12
    $region7: #{tpu_custom_call.1} parent=1 // loop_footer_branch
      %11 = sbr.rel target = $region3
    $region8: #{tpu_custom_call.1} parent=1 // loop_exit
      _

</llo_original>
